<compile_context>
chip_gen: v5e
topology: v5e:2x2
jax: 0.10.0
libtpu: 0.0.40
codegen_flags: <defaults>
</compile_context>

<pallas_src>
import jax
import jax.numpy as jnp
from jax.experimental import pallas as pl
from jax.experimental.pallas import tpu as pltpu

_TILE_N = 256     # node-dim tile for the (N, N) adjacency (fits easily in VMEM,
                  # even double-buffered on v7x's 64 MiB)
_LANE = 128       # lane width: F / H padded to multiples of this
_SUBLANE = 8


def _round_up(x, m):
    return (x + m - 1) // m * m


# --------------------------- Pallas kernels ---------------------------------

def _transform_kernel(x_ref, w_ref, out_ref):
    # xw = x @ W for one row tile (bf16 inputs, f32 accumulate, bf16 store).
    out_ref[...] = jnp.dot(
        x_ref[...], w_ref[...], preferred_element_type=jnp.float32
    ).astype(out_ref.dtype)


def _aggregate_kernel(a_ref, xw_ref, b_ref, out_ref, acc_ref):
    # out = leaky_relu(A_hat @ XW + b, 0.2) for one (TM, H) row tile,
    # reducing over the k (adjacency column) grid axis.
    k = pl.program_id(1)

    @pl.when(k == 0)
    def _():
        acc_ref[...] = jnp.zeros_like(acc_ref)

    acc_ref[...] += jnp.dot(
        a_ref[...], xw_ref[...], preferred_element_type=jnp.float32
    )

    @pl.when(k == pl.num_programs(1) - 1)
    def _():
        h = acc_ref[...] + b_ref[...]
        out_ref[...] = jnp.where(h > 0, h, 0.2 * h).astype(out_ref.dtype)


def _pool_head_kernel(p_ref, h_ref, wfc_ref, bfc_ref, out_ref, acc_ref):
    # pooled = P @ h2 (mean pool, reduced over node tiles), then the 1-unit fc
    # as a VPU/XLU reduction (no 1-column MXU matmul) + sigmoid, stored
    # lane-dense (broadcast across 128 lanes; column 0 is sliced outside).
    k = pl.program_id(0)

    @pl.when(k == 0)
    def _():
        acc_ref[...] = jnp.zeros_like(acc_ref)

    acc_ref[...] += jnp.dot(
        p_ref[...], h_ref[...], preferred_element_type=jnp.float32
    )

    @pl.when(k == pl.num_programs(0) - 1)
    def _():
        pooled = acc_ref[...]                                   # (G_pad, H_pad)
        logits = jnp.sum(pooled * wfc_ref[...], axis=-1,
                         keepdims=True) + bfc_ref[0]            # (G_pad, 1)
        sig = 1.0 / (1.0 + jnp.exp(-logits))                    # sigmoid
        out_ref[...] = jnp.broadcast_to(sig, out_ref.shape)


# --------------------------- kernel wrappers ---------------------------------

def _transform(x, w, tm):
    n_pad, f_pad = x.shape
    h_pad = w.shape[1]
    return pl.pallas_call(
        _transform_kernel,
        out_shape=jax.ShapeDtypeStruct((n_pad, h_pad), jnp.bfloat16),
        grid=(n_pad // tm,),
        in_specs=[
            pl.BlockSpec((tm, f_pad), lambda i: (i, 0)),
            pl.BlockSpec((f_pad, h_pad), lambda i: (0, 0)),
        ],
        out_specs=pl.BlockSpec((tm, h_pad), lambda i: (i, 0)),
        compiler_params=pltpu.CompilerParams(
            dimension_semantics=("parallel",)),
    )(x, w)


def _aggregate(a, xw, b, out_dtype, tm, tk):
    n_pad = a.shape[0]
    h_pad = xw.shape[1]
    return pl.pallas_call(
        _aggregate_kernel,
        out_shape=jax.ShapeDtypeStruct((n_pad, h_pad), out_dtype),
        grid=(n_pad // tm, n_pad // tk),
        in_specs=[
            pl.BlockSpec((tm, tk), lambda i, k: (i, k)),     # A_hat tile
            pl.BlockSpec((tk, h_pad), lambda i, k: (k, 0)),  # XW tile
            pl.BlockSpec((1, h_pad), lambda i, k: (0, 0)),   # bias
        ],
        out_specs=pl.BlockSpec((tm, h_pad), lambda i, k: (i, 0)),
        scratch_shapes=[pltpu.VMEM((tm, h_pad), jnp.float32)],
        compiler_params=pltpu.CompilerParams(
            dimension_semantics=("parallel", "arbitrary")),
    )(a, xw, b)


def _pool_head(p, h2, wfc_row, bfc, tk):
    g_pad = p.shape[0]
    n_pad, h_pad = h2.shape
    return pl.pallas_call(
        _pool_head_kernel,
        out_shape=jax.ShapeDtypeStruct((g_pad, _LANE), jnp.float32),
        grid=(n_pad // tk,),
        in_specs=[
            pl.BlockSpec((g_pad, tk), lambda k: (0, k)),     # P tile
            pl.BlockSpec((tk, h_pad), lambda k: (k, 0)),     # h2 tile
            pl.BlockSpec((1, h_pad), lambda k: (0, 0)),      # fc weight row
            pl.BlockSpec(memory_space=pltpu.MemorySpace.SMEM),  # fc bias scalar
        ],
        out_specs=pl.BlockSpec((g_pad, _LANE), lambda k: (0, 0)),
        scratch_shapes=[pltpu.VMEM((g_pad, h_pad), jnp.float32)],
        compiler_params=pltpu.CompilerParams(
            dimension_semantics=("arbitrary",)),
    )(p, h2, wfc_row, bfc)


# --------------------------- forward pass ------------------------------------

def gcn_forward(x, edge_index, batch, params, *, num_graphs):
    """x: (N, F) f32, edge_index: (2, E) i32, batch: (N,) i32 graph ids.
    num_graphs is static (jit-safe, no host sync)."""
    w1, b1, w2, b2, wfc, bfc = params
    N, F = x.shape
    H = w1.shape[1]
    G = int(num_graphs)

    # --- glue (plain JAX): dense normalized adjacency A_hat ---
    src, dst = edge_index[0], edge_index[1]
    A = jnp.zeros((N, N), jnp.float32).at[dst, src].set(1.0)
    A = jnp.maximum(A, jnp.eye(N, dtype=jnp.float32))     # add self-loops
    dinv = jax.lax.rsqrt(A.sum(axis=1))
    a_hat = dinv[:, None] * A * dinv[None, :]

    # --- glue: mean-pool matrix P (G, N) ---
    onehot = (batch[None, :] == jnp.arange(G)[:, None]).astype(jnp.float32)
    counts = jnp.maximum(onehot.sum(axis=1, keepdims=True), 1.0)
    P = onehot / counts

    # --- pad to TPU-friendly shapes ---
    tile = min(_TILE_N, _round_up(N, _LANE))
    n_pad = _round_up(N, tile)
    f_pad = _round_up(F, _LANE)
    h_pad = _round_up(H, _LANE)
    g_pad = _round_up(G, _SUBLANE)

    a_bf = jnp.pad(a_hat, ((0, n_pad - N), (0, n_pad - N))).astype(jnp.bfloat16)
    x_bf = jnp.pad(x, ((0, n_pad - N), (0, f_pad - F))).astype(jnp.bfloat16)
    w1_bf = jnp.pad(w1, ((0, f_pad - F), (0, h_pad - H))).astype(jnp.bfloat16)
    w2_bf = jnp.pad(w2, ((0, h_pad - H), (0, h_pad - H))).astype(jnp.bfloat16)
    b1_p = jnp.pad(b1.reshape(1, -1), ((0, 0), (0, h_pad - H)))
    b2_p = jnp.pad(b2.reshape(1, -1), ((0, 0), (0, h_pad - H)))
    wfc_row = jnp.pad(wfc.reshape(1, -1), ((0, 0), (0, h_pad - H)))
    p_pad = jnp.pad(P, ((0, g_pad - G), (0, n_pad - N)))
    bfc_s = bfc.reshape(1).astype(jnp.float32)

    # layer 1: h1 = leaky_relu(A_hat @ (x @ W1) + b1)     (kept bf16 for layer 2)
    xw1 = _transform(x_bf, w1_bf, tile)
    h1 = _aggregate(a_bf, xw1, b1_p, jnp.bfloat16, tile, tile)
    # layer 2: h2 = leaky_relu(A_hat @ (h1 @ W2) + b2)    (f32 for pooling)
    xw2 = _transform(h1, w2_bf, tile)
    h2 = _aggregate(a_bf, xw2, b2_p, jnp.float32, tile, tile)
    # mean pool + fc + sigmoid
    out = _pool_head(p_pad, h2, wfc_row, bfc_s, tile)
    return out[:G, 0]                                      # x.view(-1)


# --------------------------- params & reference ------------------------------

def init_params(key, num_node_features, hidden_channels):
    k1, k2, k3, k4, k5, k6 = jax.random.split(key, 6)
    w1 = jax.random.normal(k1, (num_node_features, hidden_channels), jnp.float32) * 0.1
    b1 = jax.random.normal(k2, (hidden_channels,), jnp.float32) * 0.1
    w2 = jax.random.normal(k3, (hidden_channels, hidden_channels), jnp.float32) * 0.1
    b2 = jax.random.normal(k4, (hidden_channels,), jnp.float32) * 0.1
    wfc = jax.random.normal(k5, (hidden_channels, 1), jnp.float32) * 0.1
    bfc = jax.random.normal(k6, (1,), jnp.float32) * 0.1
    return (w1, b1, w2, b2, wfc, bfc)


def _mm(a, b):
    return jnp.dot(a, b, precision=jax.lax.Precision.HIGHEST)


def _reference(x, edge_index, batch, params, num_graphs):
    # Pure-JAX reference of the same math, applying the same bf16 quantization
    # points the kernels use (A_hat, x, W1, W2, xw1, h1, xw2 in bf16).
    w1, b1, w2, b2, wfc, bfc = params
    N = x.shape[0]
    G = int(num_graphs)
    src, dst = edge_index[0], edge_index[1]
    A = jnp.zeros((N, N), jnp.float32).at[dst, src].set(1.0)
    A = jnp.maximum(A, jnp.eye(N, dtype=jnp.float32))
    dinv = 1.0 / jnp.sqrt(A.sum(axis=1))
    a_hat = dinv[:, None] * A * dinv[None, :]
    onehot = (batch[None, :] == jnp.arange(G)[:, None]).astype(jnp.float32)
    P = onehot / onehot.sum(axis=1, keepdims=True)

    bf = lambda t: t.astype(jnp.bfloat16).astype(jnp.float32)
    a = bf(a_hat)
    h1 = _mm(a, bf(_mm(bf(x), bf(w1)))) + b1.reshape(1, -1)
    h1 = jnp.where(h1 > 0, h1, 0.2 * h1)
    h1 = bf(h1)
    h2 = _mm(a, bf(_mm(h1, bf(w2)))) + b2.reshape(1, -1)
    h2 = jnp.where(h2 > 0, h2, 0.2 * h2)
    pooled = _mm(P, h2)
    return jax.nn.sigmoid(_mm(pooled, wfc) + bfc).reshape(-1)


# --------------------------- demo / self-test ---------------------------------

if __name__ == "__main__":
    key = jax.random.PRNGKey(0)
    N, F, H, G = 16, 8, 32, 2                  # nodes, features, hidden, graphs

    kx, kp = jax.random.split(key)
    x = jax.random.normal(kx, (N, F), jnp.float32)

    # deterministic small edge set: a ring within each 8-node graph + extras
    src = jnp.array([0, 1, 2, 3, 4, 5, 6, 7, 8, 9, 10, 11, 12, 13, 14, 15, 0, 8],
                    dtype=jnp.int32)
    dst = jnp.array([1, 2, 3, 4, 5, 6, 7, 0, 9, 10, 11, 12, 13, 14, 15, 8, 3, 12],
                    dtype=jnp.int32)
    edge_index = jnp.stack([src, dst], axis=0)
    batch = jnp.array([0] * 8 + [1] * 8, dtype=jnp.int32)

    params = init_params(kp, F, H)

    fwd = jax.jit(gcn_forward, static_argnames=("num_graphs",))
    out = jax.block_until_ready(fwd(x, edge_index, batch, params, num_graphs=G))

    ref = _reference(x, edge_index, batch, params, G)
    assert out.shape == (G,)
    assert jnp.allclose(out, ref, atol=1e-2, rtol=1e-2), (out, ref)

    print("KERNEL_OK")
</pallas_src>

<mosaic_0001>
module attributes {stable_mosaic.version = 11 : i64} {
  func.func @_aggregate_kernel(%arg0: i32, %arg1: i32, %arg2: memref<128x128xbf16, #tpu.memory_space<vmem>>, %arg3: memref<128x128xbf16, #tpu.memory_space<vmem>>, %arg4: memref<1x128xf32, #tpu.memory_space<vmem>>, %arg5: memref<128x128xbf16, #tpu.memory_space<vmem>>, %arg6: memref<128x128xf32, #tpu.memory_space<vmem>>) attributes {dimension_semantics = [#tpu.dimension_semantics<parallel>, #tpu.dimension_semantics<arbitrary>], iteration_bounds = array<i64: 1, 1>, scalar_prefetch = 0 : i64, scratch_operands = 1 : i64, tpu.core_type = #tpu.core_type<tc>, window_params = [{transform_indices = @transform_0, window_bounds = array<i64: 128, 128>}, {transform_indices = @transform_1, window_bounds = array<i64: 128, 128>}, {pipeline_mode = #tpu.pipeline_mode<synchronous>, transform_indices = @transform_2, window_bounds = array<i64: 1, 128>}, {transform_indices = @transform_3, window_bounds = array<i64: 128, 128>}]} {
    %c0_i32 = arith.constant 0 : i32
    %0 = arith.cmpi eq, %arg1, %c0_i32 : i32
    %1 = arith.extui %0 : i1 to i32
    %c0_i32_0 = arith.constant 0 : i32
    %2 = arith.cmpi ne, %1, %c0_i32_0 : i32
    scf.if %2 {
      %cst_10 = arith.constant 0.000000e+00 : f32
      %12 = vector.broadcast %cst_10 : f32 to vector<128x128xf32>
      %c0_11 = arith.constant 0 : index
      %c0_12 = arith.constant 0 : index
      %13 = vector.load %arg6[%c0_11, %c0_12] : memref<128x128xf32, #tpu.memory_space<vmem>>, vector<128x128xf32>
      tpu.vector_store %arg6[%c0_11, %c0_12], %12 {strides = array<i32>} : memref<128x128xf32, #tpu.memory_space<vmem>>, vector<128x128xf32>,
    } else {
    }
    %c0 = arith.constant 0 : index
    %c0_1 = arith.constant 0 : index
    %3 = vector.load %arg6[%c0, %c0_1] : memref<128x128xf32, #tpu.memory_space<vmem>>, vector<128x128xf32>
    %c0_2 = arith.constant 0 : index
    %c0_3 = arith.constant 0 : index
    %4 = vector.load %arg2[%c0_2, %c0_3] : memref<128x128xbf16, #tpu.memory_space<vmem>>, vector<128x128xbf16>
    %c0_4 = arith.constant 0 : index
    %c0_5 = arith.constant 0 : index
    %5 = vector.load %arg3[%c0_4, %c0_5] : memref<128x128xbf16, #tpu.memory_space<vmem>>, vector<128x128xbf16>
    %cst = arith.constant dense<0.000000e+00> : vector<128x128xf32>
    %6 = tpu.matmul %4, %5, %cst {dimension_numbers = #tpu.dot_dimension_numbers<[1], [0], [0], [1], [0, 0, 1, 1], [], []>} : vector<128x128xbf16>, vector<128x128xbf16>, vector<128x128xf32> -> vector<128x128xf32>
    %7 = arith.addf %3, %6 : vector<128x128xf32>
    %c0_6 = arith.constant 0 : index
    %c0_7 = arith.constant 0 : index
    %8 = vector.load %arg6[%c0_6, %c0_7] : memref<128x128xf32, #tpu.memory_space<vmem>>, vector<128x128xf32>
    tpu.vector_store %arg6[%c0_6, %c0_7], %7 {strides = array<i32>} : memref<128x128xf32, #tpu.memory_space<vmem>>, vector<128x128xf32>,
    %c0_i32_8 = arith.constant 0 : i32
    %9 = arith.cmpi eq, %arg1, %c0_i32_8 : i32
    %10 = arith.extui %9 : i1 to i32
    %c0_i32_9 = arith.constant 0 : i32
    %11 = arith.cmpi ne, %10, %c0_i32_9 : i32
    scf.if %11 {
      %c0_10 = arith.constant 0 : index
      %c0_11 = arith.constant 0 : index
      %12 = vector.load %arg6[%c0_10, %c0_11] : memref<128x128xf32, #tpu.memory_space<vmem>>, vector<128x128xf32>
      %c0_12 = arith.constant 0 : index
      %c0_13 = arith.constant 0 : index
      %13 = vector.load %arg4[%c0_12, %c0_13] : memref<1x128xf32, #tpu.memory_space<vmem>>, vector<1x128xf32>
      %14 = vector.broadcast %13 : vector<1x128xf32> to vector<128x128xf32>
      %15 = arith.addf %12, %14 : vector<128x128xf32>
      %cst_14 = arith.constant 0.000000e+00 : f32
      %16 = vector.broadcast %cst_14 : f32 to vector<128x128xf32>
      %17 = arith.cmpf ogt, %15, %16 : vector<128x128xf32>
      %cst_15 = arith.constant 2.000000e-01 : f32
      %18 = vector.broadcast %cst_15 : f32 to vector<128x128xf32>
      %19 = arith.mulf %18, %15 : vector<128x128xf32>
      %20 = arith.select %17, %15, %19 : vector<128x128xi1>, vector<128x128xf32>
      %21 = arith.truncf %20 : vector<128x128xf32> to vector<128x128xbf16>
      %c0_16 = arith.constant 0 : index
      %c0_17 = arith.constant 0 : index
      %22 = vector.load %arg5[%c0_16, %c0_17] : memref<128x128xbf16, #tpu.memory_space<vmem>>, vector<128x128xbf16>
      tpu.vector_store %arg5[%c0_16, %c0_17], %21 {strides = array<i32>} : memref<128x128xbf16, #tpu.memory_space<vmem>>, vector<128x128xbf16>,
    } else {
    }
    return
  }
  func.func @transform_0(%arg0: i32, %arg1: i32) -> (i32, i32) {
    %c0_i32 = arith.constant 0 : i32
    return %arg0, %arg1 : i32, i32
  }
  func.func @transform_1(%arg0: i32, %arg1: i32) -> (i32, i32) {
    %c0_i32 = arith.constant 0 : i32
    %c0_i32_0 = arith.constant 0 : i32
    return %arg1, %c0_i32 : i32, i32
  }
  func.func @transform_2(%arg0: i32, %arg1: i32) -> (i32, i32) {
    %c0_i32 = arith.constant 0 : i32
    %c0_i32_0 = arith.constant 0 : i32
    %c0_i32_1 = arith.constant 0 : i32
    return %c0_i32, %c0_i32_0 : i32, i32
  }
  func.func @transform_3(%arg0: i32, %arg1: i32) -> (i32, i32) {
    %c0_i32 = arith.constant 0 : i32
    %c0_i32_0 = arith.constant 0 : i32
    return %arg0, %c0_i32 : i32, i32
  }
}

module attributes {stable_mosaic.version = 11 : i64} {
  func.func @_transform_kernel(%arg0: i32, %arg1: memref<128x128xbf16, #tpu.memory_space<vmem>>, %arg2: memref<128x128xbf16, #tpu.memory_space<vmem>>, %arg3: memref<128x128xbf16, #tpu.memory_space<vmem>>) attributes {dimension_semantics = [#tpu.dimension_semantics<parallel>], iteration_bounds = array<i64: 1>, scalar_prefetch = 0 : i64, scratch_operands = 0 : i64, tpu.core_type = #tpu.core_type<tc>, window_params = [{transform_indices = @transform_0, window_bounds = array<i64: 128, 128>}, {pipeline_mode = #tpu.pipeline_mode<synchronous>, transform_indices = @transform_1, window_bounds = array<i64: 128, 128>}, {transform_indices = @transform_2, window_bounds = array<i64: 128, 128>}]} {
    %c0 = arith.constant 0 : index
    %c0_0 = arith.constant 0 : index
    %0 = vector.load %arg1[%c0, %c0_0] : memref<128x128xbf16, #tpu.memory_space<vmem>>, vector<128x128xbf16>
    %c0_1 = arith.constant 0 : index
    %c0_2 = arith.constant 0 : index
    %1 = vector.load %arg2[%c0_1, %c0_2] : memref<128x128xbf16, #tpu.memory_space<vmem>>, vector<128x128xbf16>
    %cst = arith.constant dense<0.000000e+00> : vector<128x128xf32>
    %2 = tpu.matmul %0, %1, %cst {dimension_numbers = #tpu.dot_dimension_numbers<[1], [0], [0], [1], [0, 0, 1, 1], [], []>} : vector<128x128xbf16>, vector<128x128xbf16>, vector<128x128xf32> -> vector<128x128xf32>
    %3 = arith.truncf %2 : vector<128x128xf32> to vector<128x128xbf16>
    %c0_3 = arith.constant 0 : index
    %c0_4 = arith.constant 0 : index
    %4 = vector.load %arg3[%c0_3, %c0_4] : memref<128x128xbf16, #tpu.memory_space<vmem>>, vector<128x128xbf16>
    tpu.vector_store %arg3[%c0_3, %c0_4], %3 {strides = array<i32>} : memref<128x128xbf16, #tpu.memory_space<vmem>>, vector<128x128xbf16>,
    return
  }
  func.func @transform_0(%arg0: i32) -> (i32, i32) {
    %c0_i32 = arith.constant 0 : i32
    %c0_i32_0 = arith.constant 0 : i32
    return %arg0, %c0_i32 : i32, i32
  }
  func.func @transform_1(%arg0: i32) -> (i32, i32) {
    %c0_i32 = arith.constant 0 : i32
    %c0_i32_0 = arith.constant 0 : i32
    %c0_i32_1 = arith.constant 0 : i32
    return %c0_i32, %c0_i32_0 : i32, i32
  }
  func.func @transform_2(%arg0: i32) -> (i32, i32) {
    %c0_i32 = arith.constant 0 : i32
    %c0_i32_0 = arith.constant 0 : i32
    return %arg0, %c0_i32 : i32, i32
  }
}

module attributes {stable_mosaic.version = 11 : i64} {
  func.func @_aggregate_kernel(%arg0: i32, %arg1: i32, %arg2: memref<128x128xbf16, #tpu.memory_space<vmem>>, %arg3: memref<128x128xbf16, #tpu.memory_space<vmem>>, %arg4: memref<1x128xf32, #tpu.memory_space<vmem>>, %arg5: memref<128x128xf32, #tpu.memory_space<vmem>>, %arg6: memref<128x128xf32, #tpu.memory_space<vmem>>) attributes {dimension_semantics = [#tpu.dimension_semantics<parallel>, #tpu.dimension_semantics<arbitrary>], iteration_bounds = array<i64: 1, 1>, scalar_prefetch = 0 : i64, scratch_operands = 1 : i64, tpu.core_type = #tpu.core_type<tc>, window_params = [{transform_indices = @transform_0, window_bounds = array<i64: 128, 128>}, {transform_indices = @transform_1, window_bounds = array<i64: 128, 128>}, {pipeline_mode = #tpu.pipeline_mode<synchronous>, transform_indices = @transform_2, window_bounds = array<i64: 1, 128>}, {transform_indices = @transform_3, window_bounds = array<i64: 128, 128>}]} {
    %c0_i32 = arith.constant 0 : i32
    %0 = arith.cmpi eq, %arg1, %c0_i32 : i32
    %1 = arith.extui %0 : i1 to i32
    %c0_i32_0 = arith.constant 0 : i32
    %2 = arith.cmpi ne, %1, %c0_i32_0 : i32
    scf.if %2 {
      %cst_10 = arith.constant 0.000000e+00 : f32
      %12 = vector.broadcast %cst_10 : f32 to vector<128x128xf32>
      %c0_11 = arith.constant 0 : index
      %c0_12 = arith.constant 0 : index
      %13 = vector.load %arg6[%c0_11, %c0_12] : memref<128x128xf32, #tpu.memory_space<vmem>>, vector<128x128xf32>
      tpu.vector_store %arg6[%c0_11, %c0_12], %12 {strides = array<i32>} : memref<128x128xf32, #tpu.memory_space<vmem>>, vector<128x128xf32>,
    } else {
    }
    %c0 = arith.constant 0 : index
    %c0_1 = arith.constant 0 : index
    %3 = vector.load %arg6[%c0, %c0_1] : memref<128x128xf32, #tpu.memory_space<vmem>>, vector<128x128xf32>
    %c0_2 = arith.constant 0 : index
    %c0_3 = arith.constant 0 : index
    %4 = vector.load %arg2[%c0_2, %c0_3] : memref<128x128xbf16, #tpu.memory_space<vmem>>, vector<128x128xbf16>
    %c0_4 = arith.constant 0 : index
    %c0_5 = arith.constant 0 : index
    %5 = vector.load %arg3[%c0_4, %c0_5] : memref<128x128xbf16, #tpu.memory_space<vmem>>, vector<128x128xbf16>
    %cst = arith.constant dense<0.000000e+00> : vector<128x128xf32>
    %6 = tpu.matmul %4, %5, %cst {dimension_numbers = #tpu.dot_dimension_numbers<[1], [0], [0], [1], [0, 0, 1, 1], [], []>} : vector<128x128xbf16>, vector<128x128xbf16>, vector<128x128xf32> -> vector<128x128xf32>
    %7 = arith.addf %3, %6 : vector<128x128xf32>
    %c0_6 = arith.constant 0 : index
    %c0_7 = arith.constant 0 : index
    %8 = vector.load %arg6[%c0_6, %c0_7] : memref<128x128xf32, #tpu.memory_space<vmem>>, vector<128x128xf32>
    tpu.vector_store %arg6[%c0_6, %c0_7], %7 {strides = array<i32>} : memref<128x128xf32, #tpu.memory_space<vmem>>, vector<128x128xf32>,
    %c0_i32_8 = arith.constant 0 : i32
    %9 = arith.cmpi eq, %arg1, %c0_i32_8 : i32
    %10 = arith.extui %9 : i1 to i32
    %c0_i32_9 = arith.constant 0 : i32
    %11 = arith.cmpi ne, %10, %c0_i32_9 : i32
    scf.if %11 {
      %c0_10 = arith.constant 0 : index
      %c0_11 = arith.constant 0 : index
      %12 = vector.load %arg6[%c0_10, %c0_11] : memref<128x128xf32, #tpu.memory_space<vmem>>, vector<128x128xf32>
      %c0_12 = arith.constant 0 : index
      %c0_13 = arith.constant 0 : index
      %13 = vector.load %arg4[%c0_12, %c0_13] : memref<1x128xf32, #tpu.memory_space<vmem>>, vector<1x128xf32>
      %14 = vector.broadcast %13 : vector<1x128xf32> to vector<128x128xf32>
      %15 = arith.addf %12, %14 : vector<128x128xf32>
      %cst_14 = arith.constant 0.000000e+00 : f32
      %16 = vector.broadcast %cst_14 : f32 to vector<128x128xf32>
      %17 = arith.cmpf ogt, %15, %16 : vector<128x128xf32>
      %cst_15 = arith.constant 2.000000e-01 : f32
      %18 = vector.broadcast %cst_15 : f32 to vector<128x128xf32>
      %19 = arith.mulf %18, %15 : vector<128x128xf32>
      %20 = arith.select %17, %15, %19 : vector<128x128xi1>, vector<128x128xf32>
      %c0_16 = arith.constant 0 : index
      %c0_17 = arith.constant 0 : index
      %21 = vector.load %arg5[%c0_16, %c0_17] : memref<128x128xf32, #tpu.memory_space<vmem>>, vector<128x128xf32>
      tpu.vector_store %arg5[%c0_16, %c0_17], %20 {strides = array<i32>} : memref<128x128xf32, #tpu.memory_space<vmem>>, vector<128x128xf32>,
    } else {
    }
    return
  }
  func.func @transform_0(%arg0: i32, %arg1: i32) -> (i32, i32) {
    %c0_i32 = arith.constant 0 : i32
    return %arg0, %arg1 : i32, i32
  }
  func.func @transform_1(%arg0: i32, %arg1: i32) -> (i32, i32) {
    %c0_i32 = arith.constant 0 : i32
    %c0_i32_0 = arith.constant 0 : i32
    return %arg1, %c0_i32 : i32, i32
  }
  func.func @transform_2(%arg0: i32, %arg1: i32) -> (i32, i32) {
    %c0_i32 = arith.constant 0 : i32
    %c0_i32_0 = arith.constant 0 : i32
    %c0_i32_1 = arith.constant 0 : i32
    return %c0_i32, %c0_i32_0 : i32, i32
  }
  func.func @transform_3(%arg0: i32, %arg1: i32) -> (i32, i32) {
    %c0_i32 = arith.constant 0 : i32
    %c0_i32_0 = arith.constant 0 : i32
    return %arg0, %c0_i32 : i32, i32
  }
}

module attributes {stable_mosaic.version = 11 : i64} {
  func.func @_pool_head_kernel(%arg0: i32, %arg1: memref<8x128xf32, #tpu.memory_space<vmem>>, %arg2: memref<128x128xf32, #tpu.memory_space<vmem>>, %arg3: memref<1x128xf32, #tpu.memory_space<vmem>>, %arg4: memref<1xf32, #tpu.memory_space<smem>>, %arg5: memref<8x128xf32, #tpu.memory_space<vmem>>, %arg6: memref<8x128xf32, #tpu.memory_space<vmem>>) attributes {dimension_semantics = [#tpu.dimension_semantics<arbitrary>], iteration_bounds = array<i64: 1>, scalar_prefetch = 0 : i64, scratch_operands = 1 : i64, tpu.core_type = #tpu.core_type<tc>, window_params = [{transform_indices = @transform_0, window_bounds = array<i64: 8, 128>}, {transform_indices = @transform_1, window_bounds = array<i64: 128, 128>}, {pipeline_mode = #tpu.pipeline_mode<synchronous>, transform_indices = @transform_2, window_bounds = array<i64: 1, 128>}, {transform_indices = @transform_3, window_bounds = array<i64: 1>}, {pipeline_mode = #tpu.pipeline_mode<synchronous>, transform_indices = @transform_4, window_bounds = array<i64: 8, 128>}]} {
    %c0_i32 = arith.constant 0 : i32
    %0 = arith.cmpi eq, %arg0, %c0_i32 : i32
    %1 = arith.extui %0 : i1 to i32
    %c0_i32_0 = arith.constant 0 : i32
    %2 = arith.cmpi ne, %1, %c0_i32_0 : i32
    scf.if %2 {
      %cst_10 = arith.constant 0.000000e+00 : f32
      %12 = vector.broadcast %cst_10 : f32 to vector<8x128xf32>
      %c0_11 = arith.constant 0 : index
      %c0_12 = arith.constant 0 : index
      %13 = vector.load %arg6[%c0_11, %c0_12] : memref<8x128xf32, #tpu.memory_space<vmem>>, vector<8x128xf32>
      tpu.vector_store %arg6[%c0_11, %c0_12], %12 {strides = array<i32>} : memref<8x128xf32, #tpu.memory_space<vmem>>, vector<8x128xf32>,
    } else {
    }
    %c0 = arith.constant 0 : index
    %c0_1 = arith.constant 0 : index
    %3 = vector.load %arg6[%c0, %c0_1] : memref<8x128xf32, #tpu.memory_space<vmem>>, vector<8x128xf32>
    %c0_2 = arith.constant 0 : index
    %c0_3 = arith.constant 0 : index
    %4 = vector.load %arg1[%c0_2, %c0_3] : memref<8x128xf32, #tpu.memory_space<vmem>>, vector<8x128xf32>
    %c0_4 = arith.constant 0 : index
    %c0_5 = arith.constant 0 : index
    %5 = vector.load %arg2[%c0_4, %c0_5] : memref<128x128xf32, #tpu.memory_space<vmem>>, vector<128x128xf32>
    %cst = arith.constant dense<0.000000e+00> : vector<8x128xf32>
    %6 = tpu.matmul %4, %5, %cst {dimension_numbers = #tpu.dot_dimension_numbers<[1], [0], [0], [1], [0, 0, 1, 1], [], []>} : vector<8x128xf32>, vector<128x128xf32>, vector<8x128xf32> -> vector<8x128xf32>
    %7 = arith.addf %3, %6 : vector<8x128xf32>
    %c0_6 = arith.constant 0 : index
    %c0_7 = arith.constant 0 : index
    %8 = vector.load %arg6[%c0_6, %c0_7] : memref<8x128xf32, #tpu.memory_space<vmem>>, vector<8x128xf32>
    tpu.vector_store %arg6[%c0_6, %c0_7], %7 {strides = array<i32>} : memref<8x128xf32, #tpu.memory_space<vmem>>, vector<8x128xf32>,
    %c0_i32_8 = arith.constant 0 : i32
    %9 = arith.cmpi eq, %arg0, %c0_i32_8 : i32
    %10 = arith.extui %9 : i1 to i32
    %c0_i32_9 = arith.constant 0 : i32
    %11 = arith.cmpi ne, %10, %c0_i32_9 : i32
    scf.if %11 {
      %c0_10 = arith.constant 0 : index
      %c0_11 = arith.constant 0 : index
      %12 = vector.load %arg6[%c0_10, %c0_11] : memref<8x128xf32, #tpu.memory_space<vmem>>, vector<8x128xf32>
      %c0_12 = arith.constant 0 : index
      %c0_13 = arith.constant 0 : index
      %13 = vector.load %arg3[%c0_12, %c0_13] : memref<1x128xf32, #tpu.memory_space<vmem>>, vector<1x128xf32>
      %14 = vector.broadcast %13 : vector<1x128xf32> to vector<8x128xf32>
      %15 = arith.mulf %12, %14 : vector<8x128xf32>
      %cst_14 = arith.constant dense<0.000000e+00> : vector<8xf32>
      %16 = vector.multi_reduction <add>, %15, %cst_14 [1] : vector<8x128xf32> to vector<8xf32>
      %17 = vector.shape_cast %16 : vector<8xf32> to vector<8x1xf32>
      %c0_15 = arith.constant 0 : index
      %18 = memref.load %arg4[%c0_15] : memref<1xf32, #tpu.memory_space<smem>>
      %19 = vector.broadcast %18 : f32 to vector<8x1xf32>
      %20 = arith.addf %17, %19 : vector<8x1xf32>
      %cst_16 = arith.constant 0.000000e+00 : f32
      %21 = vector.broadcast %cst_16 : f32 to vector<8x1xf32>
      %22 = arith.subf %21, %20 : vector<8x1xf32>
      %23 = math.exp %22 : vector<8x1xf32>
      %cst_17 = arith.constant 1.000000e+00 : f32
      %24 = vector.broadcast %cst_17 : f32 to vector<8x1xf32>
      %25 = arith.addf %24, %23 : vector<8x1xf32>
      %cst_18 = arith.constant 1.000000e+00 : f32
      %26 = vector.broadcast %cst_18 : f32 to vector<8x1xf32>
      %27 = arith.divf %26, %25 : vector<8x1xf32>
      %28 = vector.shape_cast %27 : vector<8x1xf32> to vector<8x1xf32>
      %29 = vector.broadcast %28 : vector<8x1xf32> to vector<8x128xf32>
      %c0_19 = arith.constant 0 : index
      %c0_20 = arith.constant 0 : index
      %30 = vector.load %arg5[%c0_19, %c0_20] : memref<8x128xf32, #tpu.memory_space<vmem>>, vector<8x128xf32>
      tpu.vector_store %arg5[%c0_19, %c0_20], %29 {strides = array<i32>} : memref<8x128xf32, #tpu.memory_space<vmem>>, vector<8x128xf32>,
    } else {
    }
    return
  }
  func.func @transform_0(%arg0: i32) -> (i32, i32) {
    %c0_i32 = arith.constant 0 : i32
    %c0_i32_0 = arith.constant 0 : i32
    return %c0_i32, %arg0 : i32, i32
  }
  func.func @transform_1(%arg0: i32) -> (i32, i32) {
    %c0_i32 = arith.constant 0 : i32
    %c0_i32_0 = arith.constant 0 : i32
    return %arg0, %c0_i32 : i32, i32
  }
  func.func @transform_2(%arg0: i32) -> (i32, i32) {
    %c0_i32 = arith.constant 0 : i32
    %c0_i32_0 = arith.constant 0 : i32
    %c0_i32_1 = arith.constant 0 : i32
    return %c0_i32, %c0_i32_0 : i32, i32
  }
  func.func @transform_3(%arg0: i32) -> i32 {
    %c0_i32 = arith.constant 0 : i32
    %c0_i32_0 = arith.constant 0 : i32
    return %c0_i32 : i32
  }
  func.func @transform_4(%arg0: i32) -> (i32, i32) {
    %c0_i32 = arith.constant 0 : i32
    %c0_i32_0 = arith.constant 0 : i32
    %c0_i32_1 = arith.constant 0 : i32
    return %c0_i32, %c0_i32_0 : i32, i32
  }
}

</mosaic_0001>

<llo_original>
// kernel: gcn_forward.5
$region0: #{gcn_forward.5}
  #allocation0 [shape = 'u32[]', space=smem, size = 0x4, offset = 0x4, fixed_abs, tag = 'smem constant byte address 0x4 - core index']
  #allocation1 [shape = 'u32[72,128]{1,0:T(1,128)}', space=vmem, size = 0x9000, scoped, tag = 'internal scratch']
  %s0 = inlined_call_operand.vmem [shape: bf16[128,128], index: 0, kind: input, shape index: {}]
  %s1 = inlined_call_operand.vmem [shape: bf16[128,128], index: 1, kind: input, shape index: {}]
  %s2 = inlined_call_operand.vmem [shape: bf16[128,128], index: 2, kind: output, shape index: {}]
  %s3 = sld [smem:[#allocation0]]
  $region18: #{gcn_forward.5} parent=0
    _
  %s5 = ssub.s32 1, %s3
  %s6 = scalar_select 0, %s5, %s3
  // Predicated region
  $region2: #{gcn_forward.5} parent=0 // pred_check
    _
  $region3: #{gcn_forward.5} parent=0 // pred_check_branch
    %8 = sbr.rel (0) target = $region5
  $region4: #{gcn_forward.5} parent=0 // pred_region
    _
  $region5: #{gcn_forward.5} parent=0 // pred_fallthru
    _
  // Predicated region
  $region6: #{gcn_forward.5} parent=0 // pred_check
    _
  $region7: #{gcn_forward.5} parent=0 // pred_check_branch
    %10 = sbr.rel (0) target = $region9
  $region8: #{gcn_forward.5} parent=0 // pred_region
    _
  $region9: #{gcn_forward.5} parent=0 // pred_fallthru
    _
  %v11 = vld [vmem:[%s0] sm:$0xf]
  %v12 = vld [vmem:[%s0 + $0x4] sm:$0xf]
  %v13 = vld [vmem:[%s0 + $0x8] sm:$0xf]
  %v14 = vld [vmem:[%s0 + $0xc] sm:$0xf]
  %v15 = vld [vmem:[%s0 + $0x10] sm:$0xf]
  %v16 = vld [vmem:[%s0 + $0x14] sm:$0xf]
  %v17 = vld [vmem:[%s0 + $0x18] sm:$0xf]
  %v18 = vld [vmem:[%s0 + $0x1c] sm:$0xf]
  %v19 = vld [vmem:[%s0 + $0x20] sm:$0xf]
  %v20 = vld [vmem:[%s0 + $0x24] sm:$0xf]
  %v21 = vld [vmem:[%s0 + $0x28] sm:$0xf]
  %v22 = vld [vmem:[%s0 + $0x2c] sm:$0xf]
  %v23 = vld [vmem:[%s0 + $0x30] sm:$0xf]
  %v24 = vld [vmem:[%s0 + $0x34] sm:$0xf]
  %v25 = vld [vmem:[%s0 + $0x38] sm:$0xf]
  %v26 = vld [vmem:[%s0 + $0x3c] sm:$0xf]
  %v27 = vld [vmem:[%s1] sm:$0xf]
  %v28 = vld [vmem:[%s1 + $0x4] sm:$0xf]
  %v29 = vld [vmem:[%s1 + $0x8] sm:$0xf]
  %v30 = vld [vmem:[%s1 + $0xc] sm:$0xf]
  %v31 = vld [vmem:[%s1 + $0x10] sm:$0xf]
  %v32 = vld [vmem:[%s1 + $0x14] sm:$0xf]
  %v33 = vld [vmem:[%s1 + $0x18] sm:$0xf]
  %v34 = vld [vmem:[%s1 + $0x1c] sm:$0xf]
  %v35 = vld [vmem:[%s1 + $0x20] sm:$0xf]
  %v36 = vld [vmem:[%s1 + $0x24] sm:$0xf]
  %v37 = vld [vmem:[%s1 + $0x28] sm:$0xf]
  %v38 = vld [vmem:[%s1 + $0x2c] sm:$0xf]
  %v39 = vld [vmem:[%s1 + $0x30] sm:$0xf]
  %v40 = vld [vmem:[%s1 + $0x34] sm:$0xf]
  %v41 = vld [vmem:[%s1 + $0x38] sm:$0xf]
  %v42 = vld [vmem:[%s1 + $0x3c] sm:$0xf]
  %v59 = vunpack.c.l.b16 %v11
  %v60 = vunpack.c.l.b16 %v12
  %v61 = vunpack.c.l.b16 %v13
  %v62 = vunpack.c.l.b16 %v14
  %v63 = vunpack.c.l.b16 %v15
  %v64 = vunpack.c.l.b16 %v16
  %v65 = vunpack.c.l.b16 %v17
  %v66 = vunpack.c.l.b16 %v18
  %v67 = vunpack.c.l.b16 %v19
  %v68 = vunpack.c.l.b16 %v20
  %v69 = vunpack.c.l.b16 %v21
  %v70 = vunpack.c.l.b16 %v22
  %v71 = vunpack.c.l.b16 %v23
  %v72 = vunpack.c.l.b16 %v24
  %v73 = vunpack.c.l.b16 %v25
  %v74 = vunpack.c.l.b16 %v26
  %v75 = vpack.c.b16 %v60, %v59
  %v76 = vpack.c.b16 %v62, %v61
  %v77 = vpack.c.b16 %v64, %v63
  %v78 = vpack.c.b16 %v66, %v65
  %v79 = vpack.c.b16 %v68, %v67
  %v80 = vpack.c.b16 %v70, %v69
  %v81 = vpack.c.b16 %v72, %v71
  %v82 = vpack.c.b16 %v74, %v73
  %v107 = vunpack.c.l.b16 %v27
  %v108 = vunpack.c.l.b16 %v28
  %v109 = vunpack.c.l.b16 %v29
  %v110 = vunpack.c.l.b16 %v30
  %v111 = vunpack.c.l.b16 %v31
  %v112 = vunpack.c.l.b16 %v32
  %v113 = vunpack.c.l.b16 %v33
  %v114 = vunpack.c.l.b16 %v34
  %v115 = vunpack.c.l.b16 %v35
  %v116 = vunpack.c.l.b16 %v36
  %v117 = vunpack.c.l.b16 %v37
  %v118 = vunpack.c.l.b16 %v38
  %v119 = vunpack.c.l.b16 %v39
  %v120 = vunpack.c.l.b16 %v40
  %v121 = vunpack.c.l.b16 %v41
  %v122 = vunpack.c.l.b16 %v42
  %v123 = vpack.c.b16 %v108, %v107
  %v124 = vpack.c.b16 %v110, %v109
  %v125 = vpack.c.b16 %v112, %v111
  %v126 = vpack.c.b16 %v114, %v113
  %v127 = vpack.c.b16 %v116, %v115
  %v128 = vpack.c.b16 %v118, %v117
  %v129 = vpack.c.b16 %v120, %v119
  %v130 = vpack.c.b16 %v122, %v121
  %139 = vmatpush.bf16.msra.mxu0 %v130
  %140 = vmatpush.bf16.msra.mxu0 %v129
  %141 = vmatpush.bf16.msra.mxu0 %v128
  %142 = vmatpush.bf16.msra.mxu0 %v127
  %143 = vmatpush.bf16.msra.mxu0 %v126
  %144 = vmatpush.bf16.msra.mxu0 %v125
  %145 = vmatpush.bf16.msra.mxu0 %v124
  %146 = vmatpush.bf16.msra.mxu0 %v123
  %147 = vmatmul.bf16.gmra.mxu0 %v75
  %v148 = vpop.f32.mrf.mxu0
  %v149 = vadd.f32 0.0, %v148
  %v150 = vpop.f32.mrf.mxu0
  %v151 = vadd.f32 0.0, %v150
  %152 = vmatmul.bf16.gmra.mxu0 %v76
  %v153 = vpop.f32.mrf.mxu0
  %v154 = vadd.f32 0.0, %v153
  %v155 = vpop.f32.mrf.mxu0
  %v156 = vadd.f32 0.0, %v155
  %157 = vmatmul.bf16.gmra.mxu0 %v77
  %v158 = vpop.f32.mrf.mxu0
  %v159 = vadd.f32 0.0, %v158
  %v160 = vpop.f32.mrf.mxu0
  %v161 = vadd.f32 0.0, %v160
  %162 = vmatmul.bf16.gmra.mxu0 %v78
  %v163 = vpop.f32.mrf.mxu0
  %v164 = vadd.f32 0.0, %v163
  %v165 = vpop.f32.mrf.mxu0
  %v166 = vadd.f32 0.0, %v165
  %167 = vmatmul.bf16.gmra.mxu0 %v79
  %v168 = vpop.f32.mrf.mxu0
  %v169 = vadd.f32 0.0, %v168
  %v170 = vpop.f32.mrf.mxu0
  %v171 = vadd.f32 0.0, %v170
  %172 = vmatmul.bf16.gmra.mxu0 %v80
  %v173 = vpop.f32.mrf.mxu0
  %v174 = vadd.f32 0.0, %v173
  %v175 = vpop.f32.mrf.mxu0
  %v176 = vadd.f32 0.0, %v175
  %177 = vmatmul.bf16.gmra.mxu0 %v81
  %v178 = vpop.f32.mrf.mxu0
  %v179 = vadd.f32 0.0, %v178
  %v180 = vpop.f32.mrf.mxu0
  %v181 = vadd.f32 0.0, %v180
  %182 = vmatmul.bf16.gmra.mxu0 %v82
  %v183 = vpop.f32.mrf.mxu0
  %v184 = vadd.f32 0.0, %v183
  %v185 = vpop.f32.mrf.mxu0
  %v186 = vadd.f32 0.0, %v185
  %187 = vdwg.mxu0
  %v188 = vpack.c.bf16 %v149, %v149
  %v189 = vpack.c.bf16 %v151, %v151
  %v190 = vpack.c.bf16 %v154, %v154
  %v191 = vpack.c.bf16 %v156, %v156
  %v192 = vpack.c.bf16 %v159, %v159
  %v193 = vpack.c.bf16 %v161, %v161
  %v194 = vpack.c.bf16 %v164, %v164
  %v195 = vpack.c.bf16 %v166, %v166
  %v196 = vpack.c.bf16 %v169, %v169
  %v197 = vpack.c.bf16 %v171, %v171
  %v198 = vpack.c.bf16 %v174, %v174
  %v199 = vpack.c.bf16 %v176, %v176
  %v200 = vpack.c.bf16 %v179, %v179
  %v201 = vpack.c.bf16 %v181, %v181
  %v202 = vpack.c.bf16 %v184, %v184
  %v203 = vpack.c.bf16 %v186, %v186
  %204 = vst [vmem:[%s2] sm:$0xf] %v188
  %205 = vst [vmem:[%s2 + $0x4] sm:$0xf] %v189
  %206 = vst [vmem:[%s2 + $0x8] sm:$0xf] %v190
  %207 = vst [vmem:[%s2 + $0xc] sm:$0xf] %v191
  %208 = vst [vmem:[%s2 + $0x10] sm:$0xf] %v192
  %209 = vst [vmem:[%s2 + $0x14] sm:$0xf] %v193
  %210 = vst [vmem:[%s2 + $0x18] sm:$0xf] %v194
  %211 = vst [vmem:[%s2 + $0x1c] sm:$0xf] %v195
  %212 = vst [vmem:[%s2 + $0x20] sm:$0xf] %v196
  %213 = vst [vmem:[%s2 + $0x24] sm:$0xf] %v197
  %214 = vst [vmem:[%s2 + $0x28] sm:$0xf] %v198
  %215 = vst [vmem:[%s2 + $0x2c] sm:$0xf] %v199
  %216 = vst [vmem:[%s2 + $0x30] sm:$0xf] %v200
  %217 = vst [vmem:[%s2 + $0x34] sm:$0xf] %v201
  %218 = vst [vmem:[%s2 + $0x38] sm:$0xf] %v202
  %219 = vst [vmem:[%s2 + $0x3c] sm:$0xf] %v203
  // Predicated region
  $region10: #{gcn_forward.5} parent=0 // pred_check
    _
  $region11: #{gcn_forward.5} parent=0 // pred_check_branch
    %221 = sbr.rel (0) target = $region13
  $region12: #{gcn_forward.5} parent=0 // pred_region
    _
  $region13: #{gcn_forward.5} parent=0 // pred_fallthru
    _
  // Predicated region
  $region14: #{gcn_forward.5} parent=0 // pred_check
    _
  $region15: #{gcn_forward.5} parent=0 // pred_check_branch
    %223 = sbr.rel (0) target = $region17
  $region16: #{gcn_forward.5} parent=0 // pred_region
    _
  $region17: #{gcn_forward.5} parent=0 // pred_fallthru
    _

// kernel: gcn_forward.8
$region0: #{gcn_forward.8}
  #allocation0 [shape = 'u32[]', space=smem, size = 0x4, offset = 0x4, fixed_abs, tag = 'smem constant byte address 0x4 - core index']
  #allocation1 [shape = 'u32[72,128]{1,0:T(1,128)}', space=vmem, size = 0x9000, scoped, tag = 'internal scratch']
  #allocation2 [shape = 'f32[128,128]{1,0:T(8,128)}', space=vmem, size = 0x10000, scoped, tag = 'scratch operand']
  %s0 = inlined_call_operand.vmem [shape: bf16[128,128], index: 0, kind: input, shape index: {}]
  %s1 = inlined_call_operand.vmem [shape: bf16[128,128], index: 1, kind: input, shape index: {}]
  %s2 = inlined_call_operand.vmem [shape: f32[1,128], index: 2, kind: input, shape index: {}]
  %s3 = inlined_call_operand.vmem [shape: f32[128,128], index: 3, kind: output, shape index: {}]
  %s4 = sld [smem:[#allocation0]]
  $region30: #{gcn_forward.8} parent=0
    _
  %s6 = ssub.s32 1, %s4
  %s7 = scalar_select 0, %s6, %s4
  // Predicated region
  $region2: #{gcn_forward.8} parent=0 // pred_check
    _
  $region3: #{gcn_forward.8} parent=0 // pred_check_branch
    %9 = sbr.rel (0) target = $region5
  $region4: #{gcn_forward.8} parent=0 // pred_region
    _
  $region5: #{gcn_forward.8} parent=0 // pred_fallthru
    _
  // Predicated region
  $region6: #{gcn_forward.8} parent=0 // pred_check
    _
  $region7: #{gcn_forward.8} parent=0 // pred_check_branch
    %11 = sbr.rel (0) target = $region9
  $region8: #{gcn_forward.8} parent=0 // pred_region
    _
  $region9: #{gcn_forward.8} parent=0 // pred_fallthru
    _
  // Predicated region
  $region10: #{gcn_forward.8} parent=0 // pred_check
    _
  $region11: #{gcn_forward.8} parent=0 // pred_check_branch
    %13 = sbr.rel (0) target = $region13
  $region12: #{gcn_forward.8} parent=0 // pred_region
    _
  $region13: #{gcn_forward.8} parent=0 // pred_fallthru
    _
  %p14 = scmp.eq.s32.totalorder 0, 0
  // Predicated region
  $region14: #{gcn_forward.8} parent=0 // pred_check
    %p15 = pneg %p14
  $region15: #{gcn_forward.8} parent=0 // pred_check_branch
    %17 = sbr.rel (%p15) target = $region17
  $region16: #{gcn_forward.8} parent=0 // pred_region
    %18 = vst [vmem:[#allocation2] sm:$0xff] 0.0
    %19 = vst [vmem:[#allocation2 + $0x8] sm:$0xff] 0.0
    %20 = vst [vmem:[#allocation2 + $0x10] sm:$0xff] 0.0
    %21 = vst [vmem:[#allocation2 + $0x18] sm:$0xff] 0.0
    %22 = vst [vmem:[#allocation2 + $0x20] sm:$0xff] 0.0
    %23 = vst [vmem:[#allocation2 + $0x28] sm:$0xff] 0.0
    %24 = vst [vmem:[#allocation2 + $0x30] sm:$0xff] 0.0
    %25 = vst [vmem:[#allocation2 + $0x38] sm:$0xff] 0.0
    %26 = vst [vmem:[#allocation2 + $0x40] sm:$0xff] 0.0
    %27 = vst [vmem:[#allocation2 + $0x48] sm:$0xff] 0.0
    %28 = vst [vmem:[#allocation2 + $0x50] sm:$0xff] 0.0
    %29 = vst [vmem:[#allocation2 + $0x58] sm:$0xff] 0.0
    %30 = vst [vmem:[#allocation2 + $0x60] sm:$0xff] 0.0
    %31 = vst [vmem:[#allocation2 + $0x68] sm:$0xff] 0.0
    %32 = vst [vmem:[#allocation2 + $0x70] sm:$0xff] 0.0
    %33 = vst [vmem:[#allocation2 + $0x78] sm:$0xff] 0.0
  $region17: #{gcn_forward.8} parent=0 // pred_fallthru
    _
  %v34 = vld [vmem:[#allocation2] sm:$0xff]
  %v35 = vld [vmem:[#allocation2 + $0x8] sm:$0xff]
  %v36 = vld [vmem:[#allocation2 + $0x10] sm:$0xff]
  %v37 = vld [vmem:[#allocation2 + $0x18] sm:$0xff]
  %v38 = vld [vmem:[#allocation2 + $0x20] sm:$0xff]
  %v39 = vld [vmem:[#allocation2 + $0x28] sm:$0xff]
  %v40 = vld [vmem:[#allocation2 + $0x30] sm:$0xff]
  %v41 = vld [vmem:[#allocation2 + $0x38] sm:$0xff]
  %v42 = vld [vmem:[#allocation2 + $0x40] sm:$0xff]
  %v43 = vld [vmem:[#allocation2 + $0x48] sm:$0xff]
  %v44 = vld [vmem:[#allocation2 + $0x50] sm:$0xff]
  %v45 = vld [vmem:[#allocation2 + $0x58] sm:$0xff]
  %v46 = vld [vmem:[#allocation2 + $0x60] sm:$0xff]
  %v47 = vld [vmem:[#allocation2 + $0x68] sm:$0xff]
  %v48 = vld [vmem:[#allocation2 + $0x70] sm:$0xff]
  %v49 = vld [vmem:[#allocation2 + $0x78] sm:$0xff]
  %v50 = vld [vmem:[%s0] sm:$0xf]
  %v51 = vld [vmem:[%s0 + $0x4] sm:$0xf]
  %v52 = vld [vmem:[%s0 + $0x8] sm:$0xf]
  %v53 = vld [vmem:[%s0 + $0xc] sm:$0xf]
  %v54 = vld [vmem:[%s0 + $0x10] sm:$0xf]
  %v55 = vld [vmem:[%s0 + $0x14] sm:$0xf]
  %v56 = vld [vmem:[%s0 + $0x18] sm:$0xf]
  %v57 = vld [vmem:[%s0 + $0x1c] sm:$0xf]
  %v58 = vld [vmem:[%s0 + $0x20] sm:$0xf]
  %v59 = vld [vmem:[%s0 + $0x24] sm:$0xf]
  %v60 = vld [vmem:[%s0 + $0x28] sm:$0xf]
  %v61 = vld [vmem:[%s0 + $0x2c] sm:$0xf]
  %v62 = vld [vmem:[%s0 + $0x30] sm:$0xf]
  %v63 = vld [vmem:[%s0 + $0x34] sm:$0xf]
  %v64 = vld [vmem:[%s0 + $0x38] sm:$0xf]
  %v65 = vld [vmem:[%s0 + $0x3c] sm:$0xf]
  %v66 = vld [vmem:[%s1] sm:$0xf]
  %v67 = vld [vmem:[%s1 + $0x4] sm:$0xf]
  %v68 = vld [vmem:[%s1 + $0x8] sm:$0xf]
  %v69 = vld [vmem:[%s1 + $0xc] sm:$0xf]
  %v70 = vld [vmem:[%s1 + $0x10] sm:$0xf]
  %v71 = vld [vmem:[%s1 + $0x14] sm:$0xf]
  %v72 = vld [vmem:[%s1 + $0x18] sm:$0xf]
  %v73 = vld [vmem:[%s1 + $0x1c] sm:$0xf]
  %v74 = vld [vmem:[%s1 + $0x20] sm:$0xf]
  %v75 = vld [vmem:[%s1 + $0x24] sm:$0xf]
  %v76 = vld [vmem:[%s1 + $0x28] sm:$0xf]
  %v77 = vld [vmem:[%s1 + $0x2c] sm:$0xf]
  %v78 = vld [vmem:[%s1 + $0x30] sm:$0xf]
  %v79 = vld [vmem:[%s1 + $0x34] sm:$0xf]
  %v80 = vld [vmem:[%s1 + $0x38] sm:$0xf]
  %v81 = vld [vmem:[%s1 + $0x3c] sm:$0xf]
  %v98 = vunpack.c.l.b16 %v50
  %v99 = vunpack.c.l.b16 %v51
  %v100 = vunpack.c.l.b16 %v52
  %v101 = vunpack.c.l.b16 %v53
  %v102 = vunpack.c.l.b16 %v54
  %v103 = vunpack.c.l.b16 %v55
  %v104 = vunpack.c.l.b16 %v56
  %v105 = vunpack.c.l.b16 %v57
  %v106 = vunpack.c.l.b16 %v58
  %v107 = vunpack.c.l.b16 %v59
  %v108 = vunpack.c.l.b16 %v60
  %v109 = vunpack.c.l.b16 %v61
  %v110 = vunpack.c.l.b16 %v62
  %v111 = vunpack.c.l.b16 %v63
  %v112 = vunpack.c.l.b16 %v64
  %v113 = vunpack.c.l.b16 %v65
  %v114 = vpack.c.b16 %v99, %v98
  %v115 = vpack.c.b16 %v101, %v100
  %v116 = vpack.c.b16 %v103, %v102
  %v117 = vpack.c.b16 %v105, %v104
  %v118 = vpack.c.b16 %v107, %v106
  %v119 = vpack.c.b16 %v109, %v108
  %v120 = vpack.c.b16 %v111, %v110
  %v121 = vpack.c.b16 %v113, %v112
  %v146 = vunpack.c.l.b16 %v66
  %v147 = vunpack.c.l.b16 %v67
  %v148 = vunpack.c.l.b16 %v68
  %v149 = vunpack.c.l.b16 %v69
  %v150 = vunpack.c.l.b16 %v70
  %v151 = vunpack.c.l.b16 %v71
  %v152 = vunpack.c.l.b16 %v72
  %v153 = vunpack.c.l.b16 %v73
  %v154 = vunpack.c.l.b16 %v74
  %v155 = vunpack.c.l.b16 %v75
  %v156 = vunpack.c.l.b16 %v76
  %v157 = vunpack.c.l.b16 %v77
  %v158 = vunpack.c.l.b16 %v78
  %v159 = vunpack.c.l.b16 %v79
  %v160 = vunpack.c.l.b16 %v80
  %v161 = vunpack.c.l.b16 %v81
  %v162 = vpack.c.b16 %v147, %v146
  %v163 = vpack.c.b16 %v149, %v148
  %v164 = vpack.c.b16 %v151, %v150
  %v165 = vpack.c.b16 %v153, %v152
  %v166 = vpack.c.b16 %v155, %v154
  %v167 = vpack.c.b16 %v157, %v156
  %v168 = vpack.c.b16 %v159, %v158
  %v169 = vpack.c.b16 %v161, %v160
  %178 = vmatpush.bf16.msra.mxu0 %v169
  %179 = vmatpush.bf16.msra.mxu0 %v168
  %180 = vmatpush.bf16.msra.mxu0 %v167
  %181 = vmatpush.bf16.msra.mxu0 %v166
  %182 = vmatpush.bf16.msra.mxu0 %v165
  %183 = vmatpush.bf16.msra.mxu0 %v164
  %184 = vmatpush.bf16.msra.mxu0 %v163
  %185 = vmatpush.bf16.msra.mxu0 %v162
  %186 = vmatmul.bf16.gmra.mxu0 %v114
  %v187 = vpop.f32.mrf.mxu0
  %v188 = vadd.f32 0.0, %v187
  %v189 = vpop.f32.mrf.mxu0
  %v190 = vadd.f32 0.0, %v189
  %191 = vmatmul.bf16.gmra.mxu0 %v115
  %v192 = vpop.f32.mrf.mxu0
  %v193 = vadd.f32 0.0, %v192
  %v194 = vpop.f32.mrf.mxu0
  %v195 = vadd.f32 0.0, %v194
  %196 = vmatmul.bf16.gmra.mxu0 %v116
  %v197 = vpop.f32.mrf.mxu0
  %v198 = vadd.f32 0.0, %v197
  %v199 = vpop.f32.mrf.mxu0
  %v200 = vadd.f32 0.0, %v199
  %201 = vmatmul.bf16.gmra.mxu0 %v117
  %v202 = vpop.f32.mrf.mxu0
  %v203 = vadd.f32 0.0, %v202
  %v204 = vpop.f32.mrf.mxu0
  %v205 = vadd.f32 0.0, %v204
  %206 = vmatmul.bf16.gmra.mxu0 %v118
  %v207 = vpop.f32.mrf.mxu0
  %v208 = vadd.f32 0.0, %v207
  %v209 = vpop.f32.mrf.mxu0
  %v210 = vadd.f32 0.0, %v209
  %211 = vmatmul.bf16.gmra.mxu0 %v119
  %v212 = vpop.f32.mrf.mxu0
  %v213 = vadd.f32 0.0, %v212
  %v214 = vpop.f32.mrf.mxu0
  %v215 = vadd.f32 0.0, %v214
  %216 = vmatmul.bf16.gmra.mxu0 %v120
  %v217 = vpop.f32.mrf.mxu0
  %v218 = vadd.f32 0.0, %v217
  %v219 = vpop.f32.mrf.mxu0
  %v220 = vadd.f32 0.0, %v219
  %221 = vmatmul.bf16.gmra.mxu0 %v121
  %v222 = vpop.f32.mrf.mxu0
  %v223 = vadd.f32 0.0, %v222
  %v224 = vpop.f32.mrf.mxu0
  %v225 = vadd.f32 0.0, %v224
  %226 = vdwg.mxu0
  %v227 = vadd.f32 %v34, %v188
  %v228 = vadd.f32 %v35, %v190
  %v229 = vadd.f32 %v36, %v193
  %v230 = vadd.f32 %v37, %v195
  %v231 = vadd.f32 %v38, %v198
  %v232 = vadd.f32 %v39, %v200
  %v233 = vadd.f32 %v40, %v203
  %v234 = vadd.f32 %v41, %v205
  %v235 = vadd.f32 %v42, %v208
  %v236 = vadd.f32 %v43, %v210
  %v237 = vadd.f32 %v44, %v213
  %v238 = vadd.f32 %v45, %v215
  %v239 = vadd.f32 %v46, %v218
  %v240 = vadd.f32 %v47, %v220
  %v241 = vadd.f32 %v48, %v223
  %v242 = vadd.f32 %v49, %v225
  %243 = vst [vmem:[#allocation2] sm:$0xff] %v227
  %244 = vst [vmem:[#allocation2 + $0x8] sm:$0xff] %v228
  %245 = vst [vmem:[#allocation2 + $0x10] sm:$0xff] %v229
  %246 = vst [vmem:[#allocation2 + $0x18] sm:$0xff] %v230
  %247 = vst [vmem:[#allocation2 + $0x20] sm:$0xff] %v231
  %248 = vst [vmem:[#allocation2 + $0x28] sm:$0xff] %v232
  %249 = vst [vmem:[#allocation2 + $0x30] sm:$0xff] %v233
  %250 = vst [vmem:[#allocation2 + $0x38] sm:$0xff] %v234
  %251 = vst [vmem:[#allocation2 + $0x40] sm:$0xff] %v235
  %252 = vst [vmem:[#allocation2 + $0x48] sm:$0xff] %v236
  %253 = vst [vmem:[#allocation2 + $0x50] sm:$0xff] %v237
  %254 = vst [vmem:[#allocation2 + $0x58] sm:$0xff] %v238
  %255 = vst [vmem:[#allocation2 + $0x60] sm:$0xff] %v239
  %256 = vst [vmem:[#allocation2 + $0x68] sm:$0xff] %v240
  %257 = vst [vmem:[#allocation2 + $0x70] sm:$0xff] %v241
  %258 = vst [vmem:[#allocation2 + $0x78] sm:$0xff] %v242
  // Predicated region
  $region18: #{gcn_forward.8} parent=0 // pred_check
    %p259 = pneg %p14
  $region19: #{gcn_forward.8} parent=0 // pred_check_branch
    %261 = sbr.rel (%p259) target = $region21
  $region20: #{gcn_forward.8} parent=0 // pred_region
    %v262 = vld [vmem:[#allocation2] sm:$0xff]
    %v263 = vld [vmem:[#allocation2 + $0x8] sm:$0xff]
    %v264 = vld [vmem:[#allocation2 + $0x10] sm:$0xff]
    %v265 = vld [vmem:[#allocation2 + $0x18] sm:$0xff]
    %v266 = vld [vmem:[#allocation2 + $0x20] sm:$0xff]
    %v267 = vld [vmem:[#allocation2 + $0x28] sm:$0xff]
    %v268 = vld [vmem:[#allocation2 + $0x30] sm:$0xff]
    %v269 = vld [vmem:[#allocation2 + $0x38] sm:$0xff]
    %v270 = vld [vmem:[#allocation2 + $0x40] sm:$0xff]
    %v271 = vld [vmem:[#allocation2 + $0x48] sm:$0xff]
    %v272 = vld [vmem:[#allocation2 + $0x50] sm:$0xff]
    %v273 = vld [vmem:[#allocation2 + $0x58] sm:$0xff]
    %v274 = vld [vmem:[#allocation2 + $0x60] sm:$0xff]
    %v275 = vld [vmem:[#allocation2 + $0x68] sm:$0xff]
    %v276 = vld [vmem:[#allocation2 + $0x70] sm:$0xff]
    %v277 = vld [vmem:[#allocation2 + $0x78] sm:$0xff]
    %v278 = vld [vmem:[%s2] sm:$0x1]
    %v280 = vperm.slane %v278, 0
    %v282 = vadd.f32 %v262, %v280
    %v283 = vadd.f32 %v263, %v280
    %v284 = vadd.f32 %v264, %v280
    %v285 = vadd.f32 %v265, %v280
    %v286 = vadd.f32 %v266, %v280
    %v287 = vadd.f32 %v267, %v280
    %v288 = vadd.f32 %v268, %v280
    %v289 = vadd.f32 %v269, %v280
    %v290 = vadd.f32 %v270, %v280
    %v291 = vadd.f32 %v271, %v280
    %v292 = vadd.f32 %v272, %v280
    %v293 = vadd.f32 %v273, %v280
    %v294 = vadd.f32 %v274, %v280
    %v295 = vadd.f32 %v275, %v280
    %v296 = vadd.f32 %v276, %v280
    %v297 = vadd.f32 %v277, %v280
    %vm298 = vcmp.gt.f32.partialorder %v282, 0.0
    %vm299 = vcmp.gt.f32.partialorder %v283, 0.0
    %vm300 = vcmp.gt.f32.partialorder %v284, 0.0
    %vm301 = vcmp.gt.f32.partialorder %v285, 0.0
    %vm302 = vcmp.gt.f32.partialorder %v286, 0.0
    %vm303 = vcmp.gt.f32.partialorder %v287, 0.0
    %vm304 = vcmp.gt.f32.partialorder %v288, 0.0
    %vm305 = vcmp.gt.f32.partialorder %v289, 0.0
    %vm306 = vcmp.gt.f32.partialorder %v290, 0.0
    %vm307 = vcmp.gt.f32.partialorder %v291, 0.0
    %vm308 = vcmp.gt.f32.partialorder %v292, 0.0
    %vm309 = vcmp.gt.f32.partialorder %v293, 0.0
    %vm310 = vcmp.gt.f32.partialorder %v294, 0.0
    %vm311 = vcmp.gt.f32.partialorder %v295, 0.0
    %vm312 = vcmp.gt.f32.partialorder %v296, 0.0
    %vm313 = vcmp.gt.f32.partialorder %v297, 0.0
    %v314 = vmul.f32 %v282, 0.2
    %v315 = vmul.f32 %v283, 0.2
    %v316 = vmul.f32 %v284, 0.2
    %v317 = vmul.f32 %v285, 0.2
    %v318 = vmul.f32 %v286, 0.2
    %v319 = vmul.f32 %v287, 0.2
    %v320 = vmul.f32 %v288, 0.2
    %v321 = vmul.f32 %v289, 0.2
    %v322 = vmul.f32 %v290, 0.2
    %v323 = vmul.f32 %v291, 0.2
    %v324 = vmul.f32 %v292, 0.2
    %v325 = vmul.f32 %v293, 0.2
    %v326 = vmul.f32 %v294, 0.2
    %v327 = vmul.f32 %v295, 0.2
    %v328 = vmul.f32 %v296, 0.2
    %v329 = vmul.f32 %v297, 0.2
    %v330 = vsel %vm298, %v282, %v314
    %v331 = vsel %vm299, %v283, %v315
    %v332 = vsel %vm300, %v284, %v316
    %v333 = vsel %vm301, %v285, %v317
    %v334 = vsel %vm302, %v286, %v318
    %v335 = vsel %vm303, %v287, %v319
    %v336 = vsel %vm304, %v288, %v320
    %v337 = vsel %vm305, %v289, %v321
    %v338 = vsel %vm306, %v290, %v322
    %v339 = vsel %vm307, %v291, %v323
    %v340 = vsel %vm308, %v292, %v324
    %v341 = vsel %vm309, %v293, %v325
    %v342 = vsel %vm310, %v294, %v326
    %v343 = vsel %vm311, %v295, %v327
    %v344 = vsel %vm312, %v296, %v328
    %v345 = vsel %vm313, %v297, %v329
    %346 = vst [vmem:[%s3] sm:$0xff] %v330
    %347 = vst [vmem:[%s3 + $0x8] sm:$0xff] %v331
    %348 = vst [vmem:[%s3 + $0x10] sm:$0xff] %v332
    %349 = vst [vmem:[%s3 + $0x18] sm:$0xff] %v333
    %350 = vst [vmem:[%s3 + $0x20] sm:$0xff] %v334
    %351 = vst [vmem:[%s3 + $0x28] sm:$0xff] %v335
    %352 = vst [vmem:[%s3 + $0x30] sm:$0xff] %v336
    %353 = vst [vmem:[%s3 + $0x38] sm:$0xff] %v337
    %354 = vst [vmem:[%s3 + $0x40] sm:$0xff] %v338
    %355 = vst [vmem:[%s3 + $0x48] sm:$0xff] %v339
    %356 = vst [vmem:[%s3 + $0x50] sm:$0xff] %v340
    %357 = vst [vmem:[%s3 + $0x58] sm:$0xff] %v341
    %358 = vst [vmem:[%s3 + $0x60] sm:$0xff] %v342
    %359 = vst [vmem:[%s3 + $0x68] sm:$0xff] %v343
    %360 = vst [vmem:[%s3 + $0x70] sm:$0xff] %v344
    %361 = vst [vmem:[%s3 + $0x78] sm:$0xff] %v345
  $region21: #{gcn_forward.8} parent=0 // pred_fallthru
    _
  // Predicated region
  $region22: #{gcn_forward.8} parent=0 // pred_check
    _
  $region23: #{gcn_forward.8} parent=0 // pred_check_branch
    %363 = sbr.rel (0) target = $region25
  $region24: #{gcn_forward.8} parent=0 // pred_region
    _
  $region25: #{gcn_forward.8} parent=0 // pred_fallthru
    _
  // Predicated region
  $region26: #{gcn_forward.8} parent=0 // pred_check
    _
  $region27: #{gcn_forward.8} parent=0 // pred_check_branch
    %365 = sbr.rel (0) target = $region29
  $region28: #{gcn_forward.8} parent=0 // pred_region
    _
  $region29: #{gcn_forward.8} parent=0 // pred_fallthru
    _

// kernel: gcn_forward.6
$region0: #{gcn_forward.6}
  #allocation0 [shape = 'u32[]', space=smem, size = 0x4, offset = 0x4, fixed_abs, tag = 'smem constant byte address 0x4 - core index']
  #allocation1 [shape = 'u32[72,128]{1,0:T(1,128)}', space=vmem, size = 0x9000, scoped, tag = 'internal scratch']
  #allocation2 [shape = 'f32[128,128]{1,0:T(8,128)}', space=vmem, size = 0x10000, scoped, tag = 'scratch operand']
  %s0 = inlined_call_operand.vmem [shape: bf16[128,128], index: 0, kind: input, shape index: {}]
  %s1 = inlined_call_operand.vmem [shape: bf16[128,128], index: 1, kind: input, shape index: {}]
  %s2 = inlined_call_operand.vmem [shape: f32[1,128], index: 2, kind: input, shape index: {}]
  %s3 = inlined_call_operand.vmem [shape: bf16[128,128], index: 3, kind: output, shape index: {}]
  %s4 = sld [smem:[#allocation0]]
  $region30: #{gcn_forward.6} parent=0
    _
  %s6 = ssub.s32 1, %s4
  %s7 = scalar_select 0, %s6, %s4
  // Predicated region
  $region2: #{gcn_forward.6} parent=0 // pred_check
    _
  $region3: #{gcn_forward.6} parent=0 // pred_check_branch
    %9 = sbr.rel (0) target = $region5
  $region4: #{gcn_forward.6} parent=0 // pred_region
    _
  $region5: #{gcn_forward.6} parent=0 // pred_fallthru
    _
  // Predicated region
  $region6: #{gcn_forward.6} parent=0 // pred_check
    _
  $region7: #{gcn_forward.6} parent=0 // pred_check_branch
    %11 = sbr.rel (0) target = $region9
  $region8: #{gcn_forward.6} parent=0 // pred_region
    _
  $region9: #{gcn_forward.6} parent=0 // pred_fallthru
    _
  // Predicated region
  $region10: #{gcn_forward.6} parent=0 // pred_check
    _
  $region11: #{gcn_forward.6} parent=0 // pred_check_branch
    %13 = sbr.rel (0) target = $region13
  $region12: #{gcn_forward.6} parent=0 // pred_region
    _
  $region13: #{gcn_forward.6} parent=0 // pred_fallthru
    _
  %p14 = scmp.eq.s32.totalorder 0, 0
  // Predicated region
  $region14: #{gcn_forward.6} parent=0 // pred_check
    %p15 = pneg %p14
  $region15: #{gcn_forward.6} parent=0 // pred_check_branch
    %17 = sbr.rel (%p15) target = $region17
  $region16: #{gcn_forward.6} parent=0 // pred_region
    %18 = vst [vmem:[#allocation2] sm:$0xff] 0.0
    %19 = vst [vmem:[#allocation2 + $0x8] sm:$0xff] 0.0
    %20 = vst [vmem:[#allocation2 + $0x10] sm:$0xff] 0.0
    %21 = vst [vmem:[#allocation2 + $0x18] sm:$0xff] 0.0
    %22 = vst [vmem:[#allocation2 + $0x20] sm:$0xff] 0.0
    %23 = vst [vmem:[#allocation2 + $0x28] sm:$0xff] 0.0
    %24 = vst [vmem:[#allocation2 + $0x30] sm:$0xff] 0.0
    %25 = vst [vmem:[#allocation2 + $0x38] sm:$0xff] 0.0
    %26 = vst [vmem:[#allocation2 + $0x40] sm:$0xff] 0.0
    %27 = vst [vmem:[#allocation2 + $0x48] sm:$0xff] 0.0
    %28 = vst [vmem:[#allocation2 + $0x50] sm:$0xff] 0.0
    %29 = vst [vmem:[#allocation2 + $0x58] sm:$0xff] 0.0
    %30 = vst [vmem:[#allocation2 + $0x60] sm:$0xff] 0.0
    %31 = vst [vmem:[#allocation2 + $0x68] sm:$0xff] 0.0
    %32 = vst [vmem:[#allocation2 + $0x70] sm:$0xff] 0.0
    %33 = vst [vmem:[#allocation2 + $0x78] sm:$0xff] 0.0
  $region17: #{gcn_forward.6} parent=0 // pred_fallthru
    _
  %v34 = vld [vmem:[#allocation2] sm:$0xff]
  %v35 = vld [vmem:[#allocation2 + $0x8] sm:$0xff]
  %v36 = vld [vmem:[#allocation2 + $0x10] sm:$0xff]
  %v37 = vld [vmem:[#allocation2 + $0x18] sm:$0xff]
  %v38 = vld [vmem:[#allocation2 + $0x20] sm:$0xff]
  %v39 = vld [vmem:[#allocation2 + $0x28] sm:$0xff]
  %v40 = vld [vmem:[#allocation2 + $0x30] sm:$0xff]
  %v41 = vld [vmem:[#allocation2 + $0x38] sm:$0xff]
  %v42 = vld [vmem:[#allocation2 + $0x40] sm:$0xff]
  %v43 = vld [vmem:[#allocation2 + $0x48] sm:$0xff]
  %v44 = vld [vmem:[#allocation2 + $0x50] sm:$0xff]
  %v45 = vld [vmem:[#allocation2 + $0x58] sm:$0xff]
  %v46 = vld [vmem:[#allocation2 + $0x60] sm:$0xff]
  %v47 = vld [vmem:[#allocation2 + $0x68] sm:$0xff]
  %v48 = vld [vmem:[#allocation2 + $0x70] sm:$0xff]
  %v49 = vld [vmem:[#allocation2 + $0x78] sm:$0xff]
  %v50 = vld [vmem:[%s0] sm:$0xf]
  %v51 = vld [vmem:[%s0 + $0x4] sm:$0xf]
  %v52 = vld [vmem:[%s0 + $0x8] sm:$0xf]
  %v53 = vld [vmem:[%s0 + $0xc] sm:$0xf]
  %v54 = vld [vmem:[%s0 + $0x10] sm:$0xf]
  %v55 = vld [vmem:[%s0 + $0x14] sm:$0xf]
  %v56 = vld [vmem:[%s0 + $0x18] sm:$0xf]
  %v57 = vld [vmem:[%s0 + $0x1c] sm:$0xf]
  %v58 = vld [vmem:[%s0 + $0x20] sm:$0xf]
  %v59 = vld [vmem:[%s0 + $0x24] sm:$0xf]
  %v60 = vld [vmem:[%s0 + $0x28] sm:$0xf]
  %v61 = vld [vmem:[%s0 + $0x2c] sm:$0xf]
  %v62 = vld [vmem:[%s0 + $0x30] sm:$0xf]
  %v63 = vld [vmem:[%s0 + $0x34] sm:$0xf]
  %v64 = vld [vmem:[%s0 + $0x38] sm:$0xf]
  %v65 = vld [vmem:[%s0 + $0x3c] sm:$0xf]
  %v66 = vld [vmem:[%s1] sm:$0xf]
  %v67 = vld [vmem:[%s1 + $0x4] sm:$0xf]
  %v68 = vld [vmem:[%s1 + $0x8] sm:$0xf]
  %v69 = vld [vmem:[%s1 + $0xc] sm:$0xf]
  %v70 = vld [vmem:[%s1 + $0x10] sm:$0xf]
  %v71 = vld [vmem:[%s1 + $0x14] sm:$0xf]
  %v72 = vld [vmem:[%s1 + $0x18] sm:$0xf]
  %v73 = vld [vmem:[%s1 + $0x1c] sm:$0xf]
  %v74 = vld [vmem:[%s1 + $0x20] sm:$0xf]
  %v75 = vld [vmem:[%s1 + $0x24] sm:$0xf]
  %v76 = vld [vmem:[%s1 + $0x28] sm:$0xf]
  %v77 = vld [vmem:[%s1 + $0x2c] sm:$0xf]
  %v78 = vld [vmem:[%s1 + $0x30] sm:$0xf]
  %v79 = vld [vmem:[%s1 + $0x34] sm:$0xf]
  %v80 = vld [vmem:[%s1 + $0x38] sm:$0xf]
  %v81 = vld [vmem:[%s1 + $0x3c] sm:$0xf]
  %v98 = vunpack.c.l.b16 %v50
  %v99 = vunpack.c.l.b16 %v51
  %v100 = vunpack.c.l.b16 %v52
  %v101 = vunpack.c.l.b16 %v53
  %v102 = vunpack.c.l.b16 %v54
  %v103 = vunpack.c.l.b16 %v55
  %v104 = vunpack.c.l.b16 %v56
  %v105 = vunpack.c.l.b16 %v57
  %v106 = vunpack.c.l.b16 %v58
  %v107 = vunpack.c.l.b16 %v59
  %v108 = vunpack.c.l.b16 %v60
  %v109 = vunpack.c.l.b16 %v61
  %v110 = vunpack.c.l.b16 %v62
  %v111 = vunpack.c.l.b16 %v63
  %v112 = vunpack.c.l.b16 %v64
  %v113 = vunpack.c.l.b16 %v65
  %v114 = vpack.c.b16 %v99, %v98
  %v115 = vpack.c.b16 %v101, %v100
  %v116 = vpack.c.b16 %v103, %v102
  %v117 = vpack.c.b16 %v105, %v104
  %v118 = vpack.c.b16 %v107, %v106
  %v119 = vpack.c.b16 %v109, %v108
  %v120 = vpack.c.b16 %v111, %v110
  %v121 = vpack.c.b16 %v113, %v112
  %v146 = vunpack.c.l.b16 %v66
  %v147 = vunpack.c.l.b16 %v67
  %v148 = vunpack.c.l.b16 %v68
  %v149 = vunpack.c.l.b16 %v69
  %v150 = vunpack.c.l.b16 %v70
  %v151 = vunpack.c.l.b16 %v71
  %v152 = vunpack.c.l.b16 %v72
  %v153 = vunpack.c.l.b16 %v73
  %v154 = vunpack.c.l.b16 %v74
  %v155 = vunpack.c.l.b16 %v75
  %v156 = vunpack.c.l.b16 %v76
  %v157 = vunpack.c.l.b16 %v77
  %v158 = vunpack.c.l.b16 %v78
  %v159 = vunpack.c.l.b16 %v79
  %v160 = vunpack.c.l.b16 %v80
  %v161 = vunpack.c.l.b16 %v81
  %v162 = vpack.c.b16 %v147, %v146
  %v163 = vpack.c.b16 %v149, %v148
  %v164 = vpack.c.b16 %v151, %v150
  %v165 = vpack.c.b16 %v153, %v152
  %v166 = vpack.c.b16 %v155, %v154
  %v167 = vpack.c.b16 %v157, %v156
  %v168 = vpack.c.b16 %v159, %v158
  %v169 = vpack.c.b16 %v161, %v160
  %178 = vmatpush.bf16.msra.mxu0 %v169
  %179 = vmatpush.bf16.msra.mxu0 %v168
  %180 = vmatpush.bf16.msra.mxu0 %v167
  %181 = vmatpush.bf16.msra.mxu0 %v166
  %182 = vmatpush.bf16.msra.mxu0 %v165
  %183 = vmatpush.bf16.msra.mxu0 %v164
  %184 = vmatpush.bf16.msra.mxu0 %v163
  %185 = vmatpush.bf16.msra.mxu0 %v162
  %186 = vmatmul.bf16.gmra.mxu0 %v114
  %v187 = vpop.f32.mrf.mxu0
  %v188 = vadd.f32 0.0, %v187
  %v189 = vpop.f32.mrf.mxu0
  %v190 = vadd.f32 0.0, %v189
  %191 = vmatmul.bf16.gmra.mxu0 %v115
  %v192 = vpop.f32.mrf.mxu0
  %v193 = vadd.f32 0.0, %v192
  %v194 = vpop.f32.mrf.mxu0
  %v195 = vadd.f32 0.0, %v194
  %196 = vmatmul.bf16.gmra.mxu0 %v116
  %v197 = vpop.f32.mrf.mxu0
  %v198 = vadd.f32 0.0, %v197
  %v199 = vpop.f32.mrf.mxu0
  %v200 = vadd.f32 0.0, %v199
  %201 = vmatmul.bf16.gmra.mxu0 %v117
  %v202 = vpop.f32.mrf.mxu0
  %v203 = vadd.f32 0.0, %v202
  %v204 = vpop.f32.mrf.mxu0
  %v205 = vadd.f32 0.0, %v204
  %206 = vmatmul.bf16.gmra.mxu0 %v118
  %v207 = vpop.f32.mrf.mxu0
  %v208 = vadd.f32 0.0, %v207
  %v209 = vpop.f32.mrf.mxu0
  %v210 = vadd.f32 0.0, %v209
  %211 = vmatmul.bf16.gmra.mxu0 %v119
  %v212 = vpop.f32.mrf.mxu0
  %v213 = vadd.f32 0.0, %v212
  %v214 = vpop.f32.mrf.mxu0
  %v215 = vadd.f32 0.0, %v214
  %216 = vmatmul.bf16.gmra.mxu0 %v120
  %v217 = vpop.f32.mrf.mxu0
  %v218 = vadd.f32 0.0, %v217
  %v219 = vpop.f32.mrf.mxu0
  %v220 = vadd.f32 0.0, %v219
  %221 = vmatmul.bf16.gmra.mxu0 %v121
  %v222 = vpop.f32.mrf.mxu0
  %v223 = vadd.f32 0.0, %v222
  %v224 = vpop.f32.mrf.mxu0
  %v225 = vadd.f32 0.0, %v224
  %226 = vdwg.mxu0
  %v227 = vadd.f32 %v34, %v188
  %v228 = vadd.f32 %v35, %v190
  %v229 = vadd.f32 %v36, %v193
  %v230 = vadd.f32 %v37, %v195
  %v231 = vadd.f32 %v38, %v198
  %v232 = vadd.f32 %v39, %v200
  %v233 = vadd.f32 %v40, %v203
  %v234 = vadd.f32 %v41, %v205
  %v235 = vadd.f32 %v42, %v208
  %v236 = vadd.f32 %v43, %v210
  %v237 = vadd.f32 %v44, %v213
  %v238 = vadd.f32 %v45, %v215
  %v239 = vadd.f32 %v46, %v218
  %v240 = vadd.f32 %v47, %v220
  %v241 = vadd.f32 %v48, %v223
  %v242 = vadd.f32 %v49, %v225
  %243 = vst [vmem:[#allocation2] sm:$0xff] %v227
  %244 = vst [vmem:[#allocation2 + $0x8] sm:$0xff] %v228
  %245 = vst [vmem:[#allocation2 + $0x10] sm:$0xff] %v229
  %246 = vst [vmem:[#allocation2 + $0x18] sm:$0xff] %v230
  %247 = vst [vmem:[#allocation2 + $0x20] sm:$0xff] %v231
  %248 = vst [vmem:[#allocation2 + $0x28] sm:$0xff] %v232
  %249 = vst [vmem:[#allocation2 + $0x30] sm:$0xff] %v233
  %250 = vst [vmem:[#allocation2 + $0x38] sm:$0xff] %v234
  %251 = vst [vmem:[#allocation2 + $0x40] sm:$0xff] %v235
  %252 = vst [vmem:[#allocation2 + $0x48] sm:$0xff] %v236
  %253 = vst [vmem:[#allocation2 + $0x50] sm:$0xff] %v237
  %254 = vst [vmem:[#allocation2 + $0x58] sm:$0xff] %v238
  %255 = vst [vmem:[#allocation2 + $0x60] sm:$0xff] %v239
  %256 = vst [vmem:[#allocation2 + $0x68] sm:$0xff] %v240
  %257 = vst [vmem:[#allocation2 + $0x70] sm:$0xff] %v241
  %258 = vst [vmem:[#allocation2 + $0x78] sm:$0xff] %v242
  // Predicated region
  $region18: #{gcn_forward.6} parent=0 // pred_check
    %p259 = pneg %p14
  $region19: #{gcn_forward.6} parent=0 // pred_check_branch
    %261 = sbr.rel (%p259) target = $region21
  $region20: #{gcn_forward.6} parent=0 // pred_region
    %v262 = vld [vmem:[#allocation2] sm:$0xff]
    %v263 = vld [vmem:[#allocation2 + $0x8] sm:$0xff]
    %v264 = vld [vmem:[#allocation2 + $0x10] sm:$0xff]
    %v265 = vld [vmem:[#allocation2 + $0x18] sm:$0xff]
    %v266 = vld [vmem:[#allocation2 + $0x20] sm:$0xff]
    %v267 = vld [vmem:[#allocation2 + $0x28] sm:$0xff]
    %v268 = vld [vmem:[#allocation2 + $0x30] sm:$0xff]
    %v269 = vld [vmem:[#allocation2 + $0x38] sm:$0xff]
    %v270 = vld [vmem:[#allocation2 + $0x40] sm:$0xff]
    %v271 = vld [vmem:[#allocation2 + $0x48] sm:$0xff]
    %v272 = vld [vmem:[#allocation2 + $0x50] sm:$0xff]
    %v273 = vld [vmem:[#allocation2 + $0x58] sm:$0xff]
    %v274 = vld [vmem:[#allocation2 + $0x60] sm:$0xff]
    %v275 = vld [vmem:[#allocation2 + $0x68] sm:$0xff]
    %v276 = vld [vmem:[#allocation2 + $0x70] sm:$0xff]
    %v277 = vld [vmem:[#allocation2 + $0x78] sm:$0xff]
    %v278 = vld [vmem:[%s2] sm:$0x1]
    %v280 = vperm.slane %v278, 0
    %v282 = vadd.f32 %v262, %v280
    %v283 = vadd.f32 %v263, %v280
    %v284 = vadd.f32 %v264, %v280
    %v285 = vadd.f32 %v265, %v280
    %v286 = vadd.f32 %v266, %v280
    %v287 = vadd.f32 %v267, %v280
    %v288 = vadd.f32 %v268, %v280
    %v289 = vadd.f32 %v269, %v280
    %v290 = vadd.f32 %v270, %v280
    %v291 = vadd.f32 %v271, %v280
    %v292 = vadd.f32 %v272, %v280
    %v293 = vadd.f32 %v273, %v280
    %v294 = vadd.f32 %v274, %v280
    %v295 = vadd.f32 %v275, %v280
    %v296 = vadd.f32 %v276, %v280
    %v297 = vadd.f32 %v277, %v280
    %vm298 = vcmp.gt.f32.partialorder %v282, 0.0
    %vm299 = vcmp.gt.f32.partialorder %v283, 0.0
    %vm300 = vcmp.gt.f32.partialorder %v284, 0.0
    %vm301 = vcmp.gt.f32.partialorder %v285, 0.0
    %vm302 = vcmp.gt.f32.partialorder %v286, 0.0
    %vm303 = vcmp.gt.f32.partialorder %v287, 0.0
    %vm304 = vcmp.gt.f32.partialorder %v288, 0.0
    %vm305 = vcmp.gt.f32.partialorder %v289, 0.0
    %vm306 = vcmp.gt.f32.partialorder %v290, 0.0
    %vm307 = vcmp.gt.f32.partialorder %v291, 0.0
    %vm308 = vcmp.gt.f32.partialorder %v292, 0.0
    %vm309 = vcmp.gt.f32.partialorder %v293, 0.0
    %vm310 = vcmp.gt.f32.partialorder %v294, 0.0
    %vm311 = vcmp.gt.f32.partialorder %v295, 0.0
    %vm312 = vcmp.gt.f32.partialorder %v296, 0.0
    %vm313 = vcmp.gt.f32.partialorder %v297, 0.0
    %v314 = vmul.f32 %v282, 0.2
    %v315 = vmul.f32 %v283, 0.2
    %v316 = vmul.f32 %v284, 0.2
    %v317 = vmul.f32 %v285, 0.2
    %v318 = vmul.f32 %v286, 0.2
    %v319 = vmul.f32 %v287, 0.2
    %v320 = vmul.f32 %v288, 0.2
    %v321 = vmul.f32 %v289, 0.2
    %v322 = vmul.f32 %v290, 0.2
    %v323 = vmul.f32 %v291, 0.2
    %v324 = vmul.f32 %v292, 0.2
    %v325 = vmul.f32 %v293, 0.2
    %v326 = vmul.f32 %v294, 0.2
    %v327 = vmul.f32 %v295, 0.2
    %v328 = vmul.f32 %v296, 0.2
    %v329 = vmul.f32 %v297, 0.2
    %v330 = vsel %vm298, %v282, %v314
    %v331 = vsel %vm299, %v283, %v315
    %v332 = vsel %vm300, %v284, %v316
    %v333 = vsel %vm301, %v285, %v317
    %v334 = vsel %vm302, %v286, %v318
    %v335 = vsel %vm303, %v287, %v319
    %v336 = vsel %vm304, %v288, %v320
    %v337 = vsel %vm305, %v289, %v321
    %v338 = vsel %vm306, %v290, %v322
    %v339 = vsel %vm307, %v291, %v323
    %v340 = vsel %vm308, %v292, %v324
    %v341 = vsel %vm309, %v293, %v325
    %v342 = vsel %vm310, %v294, %v326
    %v343 = vsel %vm311, %v295, %v327
    %v344 = vsel %vm312, %v296, %v328
    %v345 = vsel %vm313, %v297, %v329
    %v346 = vpack.c.bf16 %v330, %v330
    %v347 = vpack.c.bf16 %v331, %v331
    %v348 = vpack.c.bf16 %v332, %v332
    %v349 = vpack.c.bf16 %v333, %v333
    %v350 = vpack.c.bf16 %v334, %v334
    %v351 = vpack.c.bf16 %v335, %v335
    %v352 = vpack.c.bf16 %v336, %v336
    %v353 = vpack.c.bf16 %v337, %v337
    %v354 = vpack.c.bf16 %v338, %v338
    %v355 = vpack.c.bf16 %v339, %v339
    %v356 = vpack.c.bf16 %v340, %v340
    %v357 = vpack.c.bf16 %v341, %v341
    %v358 = vpack.c.bf16 %v342, %v342
    %v359 = vpack.c.bf16 %v343, %v343
    %v360 = vpack.c.bf16 %v344, %v344
    %v361 = vpack.c.bf16 %v345, %v345
    %362 = vst [vmem:[%s3] sm:$0xf] %v346
    %363 = vst [vmem:[%s3 + $0x4] sm:$0xf] %v347
    %364 = vst [vmem:[%s3 + $0x8] sm:$0xf] %v348
    %365 = vst [vmem:[%s3 + $0xc] sm:$0xf] %v349
    %366 = vst [vmem:[%s3 + $0x10] sm:$0xf] %v350
    %367 = vst [vmem:[%s3 + $0x14] sm:$0xf] %v351
    %368 = vst [vmem:[%s3 + $0x18] sm:$0xf] %v352
    %369 = vst [vmem:[%s3 + $0x1c] sm:$0xf] %v353
    %370 = vst [vmem:[%s3 + $0x20] sm:$0xf] %v354
    %371 = vst [vmem:[%s3 + $0x24] sm:$0xf] %v355
    %372 = vst [vmem:[%s3 + $0x28] sm:$0xf] %v356
    %373 = vst [vmem:[%s3 + $0x2c] sm:$0xf] %v357
    %374 = vst [vmem:[%s3 + $0x30] sm:$0xf] %v358
    %375 = vst [vmem:[%s3 + $0x34] sm:$0xf] %v359
    %376 = vst [vmem:[%s3 + $0x38] sm:$0xf] %v360
    %377 = vst [vmem:[%s3 + $0x3c] sm:$0xf] %v361
  $region21: #{gcn_forward.6} parent=0 // pred_fallthru
    _
  // Predicated region
  $region22: #{gcn_forward.6} parent=0 // pred_check
    _
  $region23: #{gcn_forward.6} parent=0 // pred_check_branch
    %379 = sbr.rel (0) target = $region25
  $region24: #{gcn_forward.6} parent=0 // pred_region
    _
  $region25: #{gcn_forward.6} parent=0 // pred_fallthru
    _
  // Predicated region
  $region26: #{gcn_forward.6} parent=0 // pred_check
    _
  $region27: #{gcn_forward.6} parent=0 // pred_check_branch
    %381 = sbr.rel (0) target = $region29
  $region28: #{gcn_forward.6} parent=0 // pred_region
    _
  $region29: #{gcn_forward.6} parent=0 // pred_fallthru
    _

// kernel: gcn_forward.9
$region0: #{gcn_forward.9}
  #allocation0 [shape = 'u32[]', space=smem, size = 0x4, offset = 0x4, fixed_abs, tag = 'smem constant byte address 0x4 - core index']
  #allocation1 [shape = 'u32[72,128]{1,0:T(1,128)}', space=vmem, size = 0x9000, scoped, tag = 'internal scratch']
  #allocation2 [shape = 'f32[8,128]{1,0:T(8,128)}', space=vmem, size = 0x1000, scoped, tag = 'scratch operand']
  #allocation3 [shape = 'f32[1]{0:T(128)S(6)}', space=smem, size = 0x200, scoped, tag = 'scoped memory for gcn_forward.9']
  %s0 = inlined_call_operand.vmem [shape: f32[8,128], index: 0, kind: input, shape index: {}]
  %s1 = inlined_call_operand.vmem [shape: f32[128,128], index: 1, kind: input, shape index: {}]
  %s2 = inlined_call_operand.vmem [shape: f32[1,128], index: 2, kind: input, shape index: {}]
  %s3 = inlined_call_operand.<no memory space> [shape: f32[1], index: 3, kind: input, shape index: {}]
  %s4 = inlined_call_operand.vmem [shape: f32[8,128], index: 4, kind: output, shape index: {}]
  %s5 = sld [smem:[#allocation0]]
  $region34: #{gcn_forward.9} parent=0
    _
  %s7 = ssub.s32 1, %s5
  %s8 = scalar_select 0, %s7, %s5
  %9 = sst [smem:[#allocation3]] %s3
  // Predicated region
  $region2: #{gcn_forward.9} parent=0 // pred_check
    _
  $region3: #{gcn_forward.9} parent=0 // pred_check_branch
    %11 = sbr.rel (0) target = $region5
  $region4: #{gcn_forward.9} parent=0 // pred_region
    _
  $region5: #{gcn_forward.9} parent=0 // pred_fallthru
    _
  // Predicated region
  $region6: #{gcn_forward.9} parent=0 // pred_check
    _
  $region7: #{gcn_forward.9} parent=0 // pred_check_branch
    %13 = sbr.rel (0) target = $region9
  $region8: #{gcn_forward.9} parent=0 // pred_region
    _
  $region9: #{gcn_forward.9} parent=0 // pred_fallthru
    _
  // Predicated region
  $region10: #{gcn_forward.9} parent=0 // pred_check
    _
  $region11: #{gcn_forward.9} parent=0 // pred_check_branch
    %15 = sbr.rel (0) target = $region13
  $region12: #{gcn_forward.9} parent=0 // pred_region
    _
  $region13: #{gcn_forward.9} parent=0 // pred_fallthru
    _
  // Predicated region
  $region14: #{gcn_forward.9} parent=0 // pred_check
    _
  $region15: #{gcn_forward.9} parent=0 // pred_check_branch
    %17 = sbr.rel (0) target = $region17
  $region16: #{gcn_forward.9} parent=0 // pred_region
    _
  $region17: #{gcn_forward.9} parent=0 // pred_fallthru
    _
  %p18 = scmp.eq.s32.totalorder 0, 0
  // Predicated region
  $region18: #{gcn_forward.9} parent=0 // pred_check
    %p19 = pneg %p18
  $region19: #{gcn_forward.9} parent=0 // pred_check_branch
    %21 = sbr.rel (%p19) target = $region21
  $region20: #{gcn_forward.9} parent=0 // pred_region
    %22 = vst [vmem:[#allocation2] sm:$0xff] 0.0
  $region21: #{gcn_forward.9} parent=0 // pred_fallthru
    _
  %v23 = vld [vmem:[#allocation2] sm:$0xff]
  %v24 = vld [vmem:[%s0] sm:$0xff]
  %v25 = vld [vmem:[%s1] sm:$0xff]
  %v26 = vld [vmem:[%s1 + $0x8] sm:$0xff]
  %v27 = vld [vmem:[%s1 + $0x10] sm:$0xff]
  %v28 = vld [vmem:[%s1 + $0x18] sm:$0xff]
  %v29 = vld [vmem:[%s1 + $0x20] sm:$0xff]
  %v30 = vld [vmem:[%s1 + $0x28] sm:$0xff]
  %v31 = vld [vmem:[%s1 + $0x30] sm:$0xff]
  %v32 = vld [vmem:[%s1 + $0x38] sm:$0xff]
  %v33 = vld [vmem:[%s1 + $0x40] sm:$0xff]
  %v34 = vld [vmem:[%s1 + $0x48] sm:$0xff]
  %v35 = vld [vmem:[%s1 + $0x50] sm:$0xff]
  %v36 = vld [vmem:[%s1 + $0x58] sm:$0xff]
  %v37 = vld [vmem:[%s1 + $0x60] sm:$0xff]
  %v38 = vld [vmem:[%s1 + $0x68] sm:$0xff]
  %v39 = vld [vmem:[%s1 + $0x70] sm:$0xff]
  %v40 = vld [vmem:[%s1 + $0x78] sm:$0xff]
  %41 = vmatpush.msra.mxu0 %v40
  %42 = vmatpush.msra.mxu0 %v39
  %43 = vmatpush.msra.mxu0 %v38
  %44 = vmatpush.msra.mxu0 %v37
  %45 = vmatpush.msra.mxu0 %v36
  %46 = vmatpush.msra.mxu0 %v35
  %47 = vmatpush.msra.mxu0 %v34
  %48 = vmatpush.msra.mxu0 %v33
  %49 = vmatpush.msra.mxu0 %v32
  %50 = vmatpush.msra.mxu0 %v31
  %51 = vmatpush.msra.mxu0 %v30
  %52 = vmatpush.msra.mxu0 %v29
  %53 = vmatpush.msra.mxu0 %v28
  %54 = vmatpush.msra.mxu0 %v27
  %55 = vmatpush.msra.mxu0 %v26
  %56 = vmatpush.msra.mxu0 %v25
  %57 = vmatmul.f32.gmra.mxu0 %v24
  %v58 = vpop.f32.mrf.mxu0
  %v59 = vadd.f32 0.0, %v58
  %60 = vdwg.mxu0
  %v61 = vadd.f32 %v23, %v59
  %62 = vst [vmem:[#allocation2] sm:$0xff] %v61
  // Predicated region
  $region22: #{gcn_forward.9} parent=0 // pred_check
    %p63 = pneg %p18
  $region23: #{gcn_forward.9} parent=0 // pred_check_branch
    %65 = sbr.rel (%p63) target = $region25
  $region24: #{gcn_forward.9} parent=0 // pred_region
    %v66 = vld [vmem:[#allocation2] sm:$0xff]
    %v67 = vld [vmem:[%s2] sm:$0x1]
    %v69 = vperm.slane %v67, 0
    %v71 = vmul.f32 %v66, %v69
    %72 = vadd.xlane.f32.xlu0 %v71
    %v73 = vpop.xlane.xlu0 %72
    %s74 = sld [smem:[#allocation3]]
    %v75 = vstv %s74
    %v76 = vadd.f32 %v73, %v75
    %v77 = vsub.f32 0.0, %v76
    %v78 = vmul.f32 %v77, 1.442695
    %v79 = vpow.pop %v78
    %v80 = vadd.f32 %v79, 1.0
    %v81 = vrcp.pop %v80
    %v82 = vmul.f32 %v80, %v81
    %v83 = vsub.f32 1.0, %v82
    %v84 = vmul.f32 %v81, %v83
    %v85 = vadd.f32 %v81, %v84
    %vm86 = vweird.f32 %v80
    %vm87 = vweird.f32 %v81
    %vm88 = vmor %vm86, %vm87
    %v89 = vsel %vm88, %v81, %v85
    %v90 = vand.u32 2147483647, %v80
    %vm91 = vcmp.eq.f32.partialorder %v90, 8.507059e+37
    %v92 = vand.u32 %v80, 2147483648
    %v93 = vor.u32 1.1754944e-38, %v92
    %v94 = vsel %vm91, %v93, %v89
    %v95 = vmul.f32 1.0, %v94
    %96 = vst [vmem:[%s4] sm:$0xff] %v95
  $region25: #{gcn_forward.9} parent=0 // pred_fallthru
    _
  // Predicated region
  $region26: #{gcn_forward.9} parent=0 // pred_check
    _
  $region27: #{gcn_forward.9} parent=0 // pred_check_branch
    %98 = sbr.rel (0) target = $region29
  $region28: #{gcn_forward.9} parent=0 // pred_region
    _
  $region29: #{gcn_forward.9} parent=0 // pred_fallthru
    _
  // Predicated region
  $region30: #{gcn_forward.9} parent=0 // pred_check
    _
  $region31: #{gcn_forward.9} parent=0 // pred_check_branch
    %100 = sbr.rel (0) target = $region33
  $region32: #{gcn_forward.9} parent=0 // pred_region
    _
  $region33: #{gcn_forward.9} parent=0 // pred_fallthru
    _

</llo_original>
